<compile_context>
chip_gen: v7x
topology: tpu7x:2x2x1
jax: 0.10.0
libtpu: 0.0.40
codegen_flags: <defaults>
</compile_context>

<pallas_src>
import functools

import jax
import jax.numpy as jnp
from jax.experimental import pallas as pl
from jax.experimental.pallas import tpu as pltpu


def _encoder_block_kernel(
    x_ref, mask_ref,
    wqkv_ref, bqkv_ref, wo_ref,
    w1_ref, b1_ref, w2_ref,
    vec_ref,
    out_ref,
    *, heads: int,
):
    x = x_ref[0]                         # (S, E) f32
    S, E = x.shape
    D = E // heads
    eps = jnp.float32(1e-5)
    inv_scale = jnp.float32(1.0 / (float(E) ** 0.5))   # module scales by sqrt(embed_size)

    # packed per-channel vectors: rows = [bo, gamma1, beta1, b2, gamma2, beta2]
    vec = vec_ref[...]                   # (6, E) f32
    bo, gamma1, beta1 = vec[0:1, :], vec[1:2, :], vec[2:3, :]
    b2, gamma2, beta2 = vec[3:4, :], vec[4:5, :], vec[5:6, :]

    # --- fused, head-batched QKV projection (one MXU call, bf16 in / f32 acc) ---
    xb = x.astype(jnp.bfloat16)
    xh = jnp.broadcast_to(xb[None, :, :], (heads, S, E))          # (H, S, E) bf16
    qkv = jnp.einsum('hse,hec->hsc', xh, wqkv_ref[...],
                     preferred_element_type=jnp.float32)          # (H, S, 3D) f32
    qkv = qkv + bqkv_ref[...]                                     # bias (H, 1, 3D)

    q = (qkv[..., 0:D] * inv_scale).astype(jnp.bfloat16)          # pre-scaled q
    k = qkv[..., D:2 * D].astype(jnp.bfloat16)
    v = qkv[..., 2 * D:3 * D].astype(jnp.bfloat16)

    # --- attention scores, batched over heads (no transpose, no concat) ---
    energy = jnp.einsum('hqd,hkd->hqk', q, k,
                        preferred_element_type=jnp.float32)       # (H, S, S) f32
    keep = (mask_ref[0].astype(jnp.int32) != 0)[None, :, :]       # (1, S, S) bool
    energy = jnp.where(keep, energy, jnp.float32(-1e20))

    # softmax (f32), denominator reciprocal on the EUP
    m = jnp.max(energy, axis=-1, keepdims=True)
    p = jnp.exp(energy - m)
    denom = jnp.sum(p, axis=-1, keepdims=True)
    attn = p * pl.reciprocal(denom, approx=True)                  # (H, S, S) f32

    ctx = jnp.einsum('hqk,hkd->hqd', attn.astype(jnp.bfloat16), v,
                     preferred_element_type=jnp.float32)          # (H, S, D) f32

    # output projection folded per head and summed (replaces concatenate + matmul)
    proj = jnp.einsum('hqd,hde->hqe', ctx.astype(jnp.bfloat16), wo_ref[...],
                      preferred_element_type=jnp.float32)         # (H, S, E) f32
    attn_out = jnp.sum(proj, axis=0) + bo                         # (S, E) f32

    # --- residual + LayerNorm 1 (f32 elementwise) ---
    h1 = x + attn_out
    mu1 = jnp.mean(h1, axis=-1, keepdims=True)
    var1 = jnp.mean((h1 - mu1) ** 2, axis=-1, keepdims=True)
    h1n = (h1 - mu1) * jax.lax.rsqrt(var1 + eps) * gamma1 + beta1
    # TODO(synk): dropout is identity (inference semantics / p=0).

    # --- feed-forward MLP (bf16 MXU, f32 accumulation) ---
    # TODO(synk): at large E/H, tile this over the hidden dim (extra grid axis)
    #             and single-buffer the resident weights for v7x's 64 MiB VMEM.
    ff = jnp.dot(h1n.astype(jnp.bfloat16), w1_ref[...],
                 preferred_element_type=jnp.float32) + b1_ref[...]
    ff = jnp.maximum(ff, 0.0)
    ff = jnp.dot(ff.astype(jnp.bfloat16), w2_ref[...],
                 preferred_element_type=jnp.float32) + b2

    # --- residual + LayerNorm 2 ---
    h2 = h1n + ff
    mu2 = jnp.mean(h2, axis=-1, keepdims=True)
    var2 = jnp.mean((h2 - mu2) ** 2, axis=-1, keepdims=True)
    out = (h2 - mu2) * jax.lax.rsqrt(var2 + eps) * gamma2 + beta2

    out_ref[0] = out


def encoder_block(x, mask, params, *, heads):
    """x: (N, S, E) f32, mask: (N, S, S) (0 = masked)."""
    N, S, E = x.shape
    assert E % heads == 0
    D = E // heads
    Hd = params["w1"].shape[-1]          # hidden = forward_expansion * E

    f32, bf16 = jnp.float32, jnp.bfloat16

    # ---- host-side weight packing (plain JAX, outside the kernel) ----
    def split_heads_cols(w):             # (E, E) -> (heads, E, D)
        return jnp.transpose(w.reshape(E, heads, D), (1, 0, 2))

    wqkv = jnp.concatenate(
        [split_heads_cols(params["wq"]),
         split_heads_cols(params["wk"]),
         split_heads_cols(params["wv"])], axis=-1).astype(bf16)   # (heads, E, 3D)
    bqkv = jnp.concatenate(
        [params["bq"].reshape(heads, D),
         params["bk"].reshape(heads, D),
         params["bv"].reshape(heads, D)], axis=-1)[:, None, :].astype(f32)  # (heads,1,3D)
    wo_h = params["wo"].reshape(heads, D, E).astype(bf16)         # (heads, D, E)
    w1 = params["w1"].astype(bf16)                                # (E, Hd)
    w2 = params["w2"].astype(bf16)                                # (Hd, E)
    b1 = params["b1"].astype(f32)                                 # (1, Hd)
    vecE = jnp.concatenate(
        [params["bo"], params["gamma1"], params["beta1"],
         params["b2"], params["gamma2"], params["beta2"]], axis=0).astype(f32)  # (6, E)

    mask_i8 = (mask != 0).astype(jnp.int8)                        # 4x smaller DMA

    def rep2(shape):
        return pl.BlockSpec(shape, lambda n: (0, 0))

    def rep3(shape):
        return pl.BlockSpec(shape, lambda n: (0, 0, 0))

    kernel = functools.partial(_encoder_block_kernel, heads=heads)

    # TODO(synk): for realistic (large S, E) shapes, flatten/tile rows into
    #             128-aligned blocks and use an online-softmax over key tiles so
    #             the (S, S) scores never fully materialize.
    return pl.pallas_call(
        kernel,
        out_shape=jax.ShapeDtypeStruct((N, S, E), jnp.float32),
        grid=(N,),
        in_specs=[
            pl.BlockSpec((1, S, E), lambda n: (n, 0, 0)),   # x
            pl.BlockSpec((1, S, S), lambda n: (n, 0, 0)),   # mask (int8)
            rep3((heads, E, 3 * D)),                        # fused QKV weights
            rep3((heads, 1, 3 * D)),                        # fused QKV bias
            rep3((heads, D, E)),                            # output proj weights
            rep2((E, Hd)),                                  # w1
            rep2((1, Hd)),                                  # b1
            rep2((Hd, E)),                                  # w2
            rep2((6, E)),                                   # packed bo/gamma/beta/b2
        ],
        out_specs=pl.BlockSpec((1, S, E), lambda n: (n, 0, 0)),
        compiler_params=pltpu.CompilerParams(
            dimension_semantics=("parallel",)),
    )(x, mask_i8, wqkv, bqkv, wo_h, w1, b1, w2, vecE)


def init_params(key, embed_size, heads, forward_expansion):
    E = embed_size
    H = forward_expansion * E
    ks = jax.random.split(key, 12)
    std = 0.02

    def lin(k, fan_in, fan_out):
        return (std * jax.random.normal(k, (fan_in, fan_out), jnp.float32),
                std * jax.random.normal(jax.random.fold_in(k, 1),
                                        (1, fan_out), jnp.float32))

    wq, bq = lin(ks[0], E, E)
    wk, bk = lin(ks[1], E, E)
    wv, bv = lin(ks[2], E, E)
    wo, bo = lin(ks[3], E, E)
    w1, b1 = lin(ks[4], E, H)
    w2, b2 = lin(ks[5], H, E)
    gamma1 = 1.0 + 0.1 * jax.random.normal(ks[6], (1, E), jnp.float32)
    beta1 = 0.1 * jax.random.normal(ks[7], (1, E), jnp.float32)
    gamma2 = 1.0 + 0.1 * jax.random.normal(ks[8], (1, E), jnp.float32)
    beta2 = 0.1 * jax.random.normal(ks[9], (1, E), jnp.float32)
    return dict(wq=wq, bq=bq, wk=wk, bk=bk, wv=wv, bv=bv, wo=wo, bo=bo,
                gamma1=gamma1, beta1=beta1, gamma2=gamma2, beta2=beta2,
                w1=w1, b1=b1, w2=w2, b2=b2)


if __name__ == "__main__":
    # Small shapes consistent with the module: batch=2, seq=8, embed=32,
    # heads=4 (head_dim=8), forward_expansion=4 (hidden=128), p=0.0.
    N, S, E, HEADS, FEXP = 2, 8, 32, 4, 4

    key = jax.random.PRNGKey(0)
    kx, km, kp = jax.random.split(key, 3)
    x = jax.random.normal(kx, (N, S, E), jnp.float32)
    # mask: keep everything visible except last key position of batch 1
    mask = jnp.ones((N, S, S), jnp.float32)
    mask = mask.at[1, :, -1].set(0.0)

    params = init_params(kp, E, HEADS, FEXP)

    out = encoder_block(x, mask, params, heads=HEADS)
    jax.block_until_ready(out)
    assert out.shape == (N, S, E)
    print("KERNEL_OK")
</pallas_src>

<mosaic_0001>
module attributes {stable_mosaic.version = 11 : i64} {
  func.func @_encoder_block_kernel(%arg0: i32, %arg1: memref<1x8x32xf32, #tpu.memory_space<vmem>>, %arg2: memref<1x8x8xi8, #tpu.memory_space<vmem>>, %arg3: memref<4x32x24xbf16, #tpu.memory_space<vmem>>, %arg4: memref<4x1x24xf32, #tpu.memory_space<vmem>>, %arg5: memref<4x8x32xbf16, #tpu.memory_space<vmem>>, %arg6: memref<32x128xbf16, #tpu.memory_space<vmem>>, %arg7: memref<1x128xf32, #tpu.memory_space<vmem>>, %arg8: memref<128x32xbf16, #tpu.memory_space<vmem>>, %arg9: memref<6x32xf32, #tpu.memory_space<vmem>>, %arg10: memref<1x8x32xf32, #tpu.memory_space<vmem>>) attributes {dimension_semantics = [#tpu.dimension_semantics<parallel>], iteration_bounds = array<i64: 2>, scalar_prefetch = 0 : i64, scratch_operands = 0 : i64, tpu.core_type = #tpu.core_type<tc>, window_params = [{transform_indices = @transform_0, window_bounds = array<i64: 1, 8, 32>}, {transform_indices = @transform_1, window_bounds = array<i64: 1, 8, 8>}, {pipeline_mode = #tpu.pipeline_mode<synchronous>, transform_indices = @transform_2, window_bounds = array<i64: 4, 32, 24>}, {pipeline_mode = #tpu.pipeline_mode<synchronous>, transform_indices = @transform_3, window_bounds = array<i64: 4, 1, 24>}, {pipeline_mode = #tpu.pipeline_mode<synchronous>, transform_indices = @transform_4, window_bounds = array<i64: 4, 8, 32>}, {pipeline_mode = #tpu.pipeline_mode<synchronous>, transform_indices = @transform_5, window_bounds = array<i64: 32, 128>}, {pipeline_mode = #tpu.pipeline_mode<synchronous>, transform_indices = @transform_6, window_bounds = array<i64: 1, 128>}, {pipeline_mode = #tpu.pipeline_mode<synchronous>, transform_indices = @transform_7, window_bounds = array<i64: 128, 32>}, {pipeline_mode = #tpu.pipeline_mode<synchronous>, transform_indices = @transform_8, window_bounds = array<i64: 6, 32>}, {transform_indices = @transform_9, window_bounds = array<i64: 1, 8, 32>}]} {
    %c0 = arith.constant 0 : index
    %c0_0 = arith.constant 0 : index
    %c0_1 = arith.constant 0 : index
    %0 = vector.load %arg1[%c0, %c0_0, %c0_1] : memref<1x8x32xf32, #tpu.memory_space<vmem>>, vector<1x8x32xf32>
    %1 = vector.shape_cast %0 : vector<1x8x32xf32> to vector<8x32xf32>
    %c0_2 = arith.constant 0 : index
    %c0_3 = arith.constant 0 : index
    %2 = vector.load %arg9[%c0_2, %c0_3] : memref<6x32xf32, #tpu.memory_space<vmem>>, vector<6x32xf32>
    %3 = vector.extract_strided_slice %2 {offsets = [0, 0], sizes = [1, 32], strides = [1, 1]} : vector<6x32xf32> to vector<1x32xf32>
    %4 = vector.extract_strided_slice %2 {offsets = [1, 0], sizes = [1, 32], strides = [1, 1]} : vector<6x32xf32> to vector<1x32xf32>
    %5 = vector.extract_strided_slice %2 {offsets = [2, 0], sizes = [1, 32], strides = [1, 1]} : vector<6x32xf32> to vector<1x32xf32>
    %6 = vector.extract_strided_slice %2 {offsets = [3, 0], sizes = [1, 32], strides = [1, 1]} : vector<6x32xf32> to vector<1x32xf32>
    %7 = vector.extract_strided_slice %2 {offsets = [4, 0], sizes = [1, 32], strides = [1, 1]} : vector<6x32xf32> to vector<1x32xf32>
    %8 = vector.extract_strided_slice %2 {offsets = [5, 0], sizes = [1, 32], strides = [1, 1]} : vector<6x32xf32> to vector<1x32xf32>
    %9 = arith.truncf %1 : vector<8x32xf32> to vector<8x32xbf16>
    %10 = vector.shape_cast %9 : vector<8x32xbf16> to vector<1x8x32xbf16>
    %11 = vector.shape_cast %10 : vector<1x8x32xbf16> to vector<1x8x32xbf16>
    %12 = vector.broadcast %11 : vector<1x8x32xbf16> to vector<4x8x32xbf16>
    %c0_4 = arith.constant 0 : index
    %c0_5 = arith.constant 0 : index
    %c0_6 = arith.constant 0 : index
    %13 = vector.load %arg3[%c0_4, %c0_5, %c0_6] : memref<4x32x24xbf16, #tpu.memory_space<vmem>>, vector<4x32x24xbf16>
    "tpu.trace_start"() <{level = 10 : i32, message = "hse,hec->hsc"}> : () -> ()
    %cst = arith.constant dense<0.000000e+00> : vector<4x8x24xf32>
    %14 = tpu.matmul %12, %13, %cst {dimension_numbers = #tpu.dot_dimension_numbers<[2], [1], [1], [2], [0, 0, 0, 1, 1, 2], [0], [0]>} : vector<4x8x32xbf16>, vector<4x32x24xbf16>, vector<4x8x24xf32> -> vector<4x8x24xf32>
    "tpu.trace_stop"() : () -> ()
    %c0_7 = arith.constant 0 : index
    %c0_8 = arith.constant 0 : index
    %c0_9 = arith.constant 0 : index
    %15 = vector.load %arg4[%c0_7, %c0_8, %c0_9] : memref<4x1x24xf32, #tpu.memory_space<vmem>>, vector<4x1x24xf32>
    %16 = vector.broadcast %15 : vector<4x1x24xf32> to vector<4x8x24xf32>
    %17 = arith.addf %14, %16 : vector<4x8x24xf32>
    %18 = vector.extract_strided_slice %17 {offsets = [0, 0, 0], sizes = [4, 8, 8], strides = [1, 1, 1]} : vector<4x8x24xf32> to vector<4x8x8xf32>
    %cst_10 = arith.constant 0.176776692 : f32
    %19 = vector.broadcast %cst_10 : f32 to vector<4x8x8xf32>
    %20 = arith.mulf %18, %19 : vector<4x8x8xf32>
    %21 = arith.truncf %20 : vector<4x8x8xf32> to vector<4x8x8xbf16>
    %22 = vector.extract_strided_slice %17 {offsets = [0, 0, 8], sizes = [4, 8, 8], strides = [1, 1, 1]} : vector<4x8x24xf32> to vector<4x8x8xf32>
    %23 = arith.truncf %22 : vector<4x8x8xf32> to vector<4x8x8xbf16>
    %24 = vector.extract_strided_slice %17 {offsets = [0, 0, 16], sizes = [4, 8, 8], strides = [1, 1, 1]} : vector<4x8x24xf32> to vector<4x8x8xf32>
    %25 = arith.truncf %24 : vector<4x8x8xf32> to vector<4x8x8xbf16>
    "tpu.trace_start"() <{level = 10 : i32, message = "hqd,hkd->hqk"}> : () -> ()
    %cst_11 = arith.constant dense<0.000000e+00> : vector<4x8x8xf32>
    %26 = tpu.matmul %21, %23, %cst_11 {dimension_numbers = #tpu.dot_dimension_numbers<[2], [2], [1], [1], [0, 0, 0, 1, 1, 1], [0], [0]>} : vector<4x8x8xbf16>, vector<4x8x8xbf16>, vector<4x8x8xf32> -> vector<4x8x8xf32>
    "tpu.trace_stop"() : () -> ()
    %c0_12 = arith.constant 0 : index
    %c0_13 = arith.constant 0 : index
    %c0_14 = arith.constant 0 : index
    %27 = vector.load %arg2[%c0_12, %c0_13, %c0_14] : memref<1x8x8xi8, #tpu.memory_space<vmem>>, vector<1x8x8xi8>
    %28 = vector.shape_cast %27 : vector<1x8x8xi8> to vector<8x8xi8>
    %29 = arith.extsi %28 : vector<8x8xi8> to vector<8x8xi32>
    %c0_i32 = arith.constant 0 : i32
    %30 = vector.broadcast %c0_i32 : i32 to vector<8x8xi32>
    %31 = arith.cmpi ne, %29, %30 : vector<8x8xi32>
    %32 = vector.shape_cast %31 : vector<8x8xi1> to vector<1x8x8xi1>
    %cst_15 = arith.constant -1.000000e+20 : f32
    %33 = vector.shape_cast %32 : vector<1x8x8xi1> to vector<1x8x8xi1>
    %34 = vector.broadcast %33 : vector<1x8x8xi1> to vector<4x8x8xi1>
    %35 = vector.broadcast %cst_15 : f32 to vector<4x8x8xf32>
    %36 = arith.select %34, %26, %35 : vector<4x8x8xi1>, vector<4x8x8xf32>
    %cst_16 = arith.constant dense<0xFF800000> : vector<4x8xf32>
    %37 = vector.multi_reduction <maximumf>, %36, %cst_16 [2] : vector<4x8x8xf32> to vector<4x8xf32>
    %38 = vector.shape_cast %37 : vector<4x8xf32> to vector<4x8x1xf32>
    %39 = vector.broadcast %38 : vector<4x8x1xf32> to vector<4x8x8xf32>
    %40 = arith.subf %36, %39 : vector<4x8x8xf32>
    %41 = math.exp %40 : vector<4x8x8xf32>
    %cst_17 = arith.constant dense<0.000000e+00> : vector<4x8xf32>
    %42 = vector.multi_reduction <add>, %41, %cst_17 [2] : vector<4x8x8xf32> to vector<4x8xf32>
    %43 = vector.shape_cast %42 : vector<4x8xf32> to vector<4x8x1xf32>
    %44 = tpu.reciprocal %43 {approx = true} : vector<4x8x1xf32> -> vector<4x8x1xf32>
    %45 = vector.broadcast %44 : vector<4x8x1xf32> to vector<4x8x8xf32>
    %46 = arith.mulf %41, %45 : vector<4x8x8xf32>
    %47 = arith.truncf %46 : vector<4x8x8xf32> to vector<4x8x8xbf16>
    "tpu.trace_start"() <{level = 10 : i32, message = "hqk,hkd->hqd"}> : () -> ()
    %cst_18 = arith.constant dense<0.000000e+00> : vector<4x8x8xf32>
    %48 = tpu.matmul %47, %25, %cst_18 {dimension_numbers = #tpu.dot_dimension_numbers<[2], [1], [1], [2], [0, 0, 0, 1, 1, 2], [0], [0]>} : vector<4x8x8xbf16>, vector<4x8x8xbf16>, vector<4x8x8xf32> -> vector<4x8x8xf32>
    "tpu.trace_stop"() : () -> ()
    %49 = arith.truncf %48 : vector<4x8x8xf32> to vector<4x8x8xbf16>
    %c0_19 = arith.constant 0 : index
    %c0_20 = arith.constant 0 : index
    %c0_21 = arith.constant 0 : index
    %50 = vector.load %arg5[%c0_19, %c0_20, %c0_21] : memref<4x8x32xbf16, #tpu.memory_space<vmem>>, vector<4x8x32xbf16>
    "tpu.trace_start"() <{level = 10 : i32, message = "hqd,hde->hqe"}> : () -> ()
    %cst_22 = arith.constant dense<0.000000e+00> : vector<4x8x32xf32>
    %51 = tpu.matmul %49, %50, %cst_22 {dimension_numbers = #tpu.dot_dimension_numbers<[2], [1], [1], [2], [0, 0, 0, 1, 1, 2], [0], [0]>} : vector<4x8x8xbf16>, vector<4x8x32xbf16>, vector<4x8x32xf32> -> vector<4x8x32xf32>
    "tpu.trace_stop"() : () -> ()
    %cst_23 = arith.constant dense<0.000000e+00> : vector<8x32xf32>
    %52 = vector.multi_reduction <add>, %51, %cst_23 [0] : vector<4x8x32xf32> to vector<8x32xf32>
    %53 = vector.broadcast %3 : vector<1x32xf32> to vector<8x32xf32>
    %54 = arith.addf %52, %53 : vector<8x32xf32>
    %55 = arith.addf %1, %54 : vector<8x32xf32>
    %cst_24 = arith.constant dense<0.000000e+00> : vector<8xf32>
    %56 = vector.multi_reduction <add>, %55, %cst_24 [1] : vector<8x32xf32> to vector<8xf32>
    %57 = vector.shape_cast %56 : vector<8xf32> to vector<8x1xf32>
    %cst_25 = arith.constant 3.200000e+01 : f32
    %58 = vector.broadcast %cst_25 : f32 to vector<8x1xf32>
    %59 = arith.divf %57, %58 : vector<8x1xf32>
    %60 = vector.broadcast %59 : vector<8x1xf32> to vector<8x32xf32>
    %61 = arith.subf %55, %60 : vector<8x32xf32>
    %62 = arith.mulf %61, %61 : vector<8x32xf32>
    %cst_26 = arith.constant dense<0.000000e+00> : vector<8xf32>
    %63 = vector.multi_reduction <add>, %62, %cst_26 [1] : vector<8x32xf32> to vector<8xf32>
    %64 = vector.shape_cast %63 : vector<8xf32> to vector<8x1xf32>
    %cst_27 = arith.constant 3.200000e+01 : f32
    %65 = vector.broadcast %cst_27 : f32 to vector<8x1xf32>
    %66 = arith.divf %64, %65 : vector<8x1xf32>
    %67 = vector.broadcast %59 : vector<8x1xf32> to vector<8x32xf32>
    %68 = arith.subf %55, %67 : vector<8x32xf32>
    %cst_28 = arith.constant 9.99999974E-6 : f32
    %69 = vector.broadcast %cst_28 : f32 to vector<8x1xf32>
    %70 = arith.addf %66, %69 : vector<8x1xf32>
    %71 = math.rsqrt %70 : vector<8x1xf32>
    %72 = vector.broadcast %71 : vector<8x1xf32> to vector<8x32xf32>
    %73 = arith.mulf %68, %72 : vector<8x32xf32>
    %74 = vector.broadcast %4 : vector<1x32xf32> to vector<8x32xf32>
    %75 = arith.mulf %73, %74 : vector<8x32xf32>
    %76 = vector.broadcast %5 : vector<1x32xf32> to vector<8x32xf32>
    %77 = arith.addf %75, %76 : vector<8x32xf32>
    %78 = arith.truncf %77 : vector<8x32xf32> to vector<8x32xbf16>
    %c0_29 = arith.constant 0 : index
    %c0_30 = arith.constant 0 : index
    %79 = vector.load %arg6[%c0_29, %c0_30] : memref<32x128xbf16, #tpu.memory_space<vmem>>, vector<32x128xbf16>
    %cst_31 = arith.constant dense<0.000000e+00> : vector<8x128xf32>
    %80 = tpu.matmul %78, %79, %cst_31 {dimension_numbers = #tpu.dot_dimension_numbers<[1], [0], [0], [1], [0, 0, 1, 1], [], []>} : vector<8x32xbf16>, vector<32x128xbf16>, vector<8x128xf32> -> vector<8x128xf32>
    %c0_32 = arith.constant 0 : index
    %c0_33 = arith.constant 0 : index
    %81 = vector.load %arg7[%c0_32, %c0_33] : memref<1x128xf32, #tpu.memory_space<vmem>>, vector<1x128xf32>
    %82 = vector.broadcast %81 : vector<1x128xf32> to vector<8x128xf32>
    %83 = arith.addf %80, %82 : vector<8x128xf32>
    %cst_34 = arith.constant 0.000000e+00 : f32
    %84 = vector.broadcast %cst_34 : f32 to vector<8x128xf32>
    %85 = arith.maximumf %83, %84 : vector<8x128xf32>
    %86 = arith.truncf %85 : vector<8x128xf32> to vector<8x128xbf16>
    %c0_35 = arith.constant 0 : index
    %c0_36 = arith.constant 0 : index
    %87 = vector.load %arg8[%c0_35, %c0_36] : memref<128x32xbf16, #tpu.memory_space<vmem>>, vector<128x32xbf16>
    %cst_37 = arith.constant dense<0.000000e+00> : vector<8x32xf32>
    %88 = tpu.matmul %86, %87, %cst_37 {dimension_numbers = #tpu.dot_dimension_numbers<[1], [0], [0], [1], [0, 0, 1, 1], [], []>} : vector<8x128xbf16>, vector<128x32xbf16>, vector<8x32xf32> -> vector<8x32xf32>
    %89 = vector.broadcast %6 : vector<1x32xf32> to vector<8x32xf32>
    %90 = arith.addf %88, %89 : vector<8x32xf32>
    %91 = arith.addf %77, %90 : vector<8x32xf32>
    %cst_38 = arith.constant dense<0.000000e+00> : vector<8xf32>
    %92 = vector.multi_reduction <add>, %91, %cst_38 [1] : vector<8x32xf32> to vector<8xf32>
    %93 = vector.shape_cast %92 : vector<8xf32> to vector<8x1xf32>
    %cst_39 = arith.constant 3.200000e+01 : f32
    %94 = vector.broadcast %cst_39 : f32 to vector<8x1xf32>
    %95 = arith.divf %93, %94 : vector<8x1xf32>
    %96 = vector.broadcast %95 : vector<8x1xf32> to vector<8x32xf32>
    %97 = arith.subf %91, %96 : vector<8x32xf32>
    %98 = arith.mulf %97, %97 : vector<8x32xf32>
    %cst_40 = arith.constant dense<0.000000e+00> : vector<8xf32>
    %99 = vector.multi_reduction <add>, %98, %cst_40 [1] : vector<8x32xf32> to vector<8xf32>
    %100 = vector.shape_cast %99 : vector<8xf32> to vector<8x1xf32>
    %cst_41 = arith.constant 3.200000e+01 : f32
    %101 = vector.broadcast %cst_41 : f32 to vector<8x1xf32>
    %102 = arith.divf %100, %101 : vector<8x1xf32>
    %103 = vector.broadcast %95 : vector<8x1xf32> to vector<8x32xf32>
    %104 = arith.subf %91, %103 : vector<8x32xf32>
    %cst_42 = arith.constant 9.99999974E-6 : f32
    %105 = vector.broadcast %cst_42 : f32 to vector<8x1xf32>
    %106 = arith.addf %102, %105 : vector<8x1xf32>
    %107 = math.rsqrt %106 : vector<8x1xf32>
    %108 = vector.broadcast %107 : vector<8x1xf32> to vector<8x32xf32>
    %109 = arith.mulf %104, %108 : vector<8x32xf32>
    %110 = vector.broadcast %7 : vector<1x32xf32> to vector<8x32xf32>
    %111 = arith.mulf %109, %110 : vector<8x32xf32>
    %112 = vector.broadcast %8 : vector<1x32xf32> to vector<8x32xf32>
    %113 = arith.addf %111, %112 : vector<8x32xf32>
    %c0_43 = arith.constant 0 : index
    %c0_44 = arith.constant 0 : index
    %c0_45 = arith.constant 0 : index
    %114 = vector.load %arg10[%c0_43, %c0_44, %c0_45] : memref<1x8x32xf32, #tpu.memory_space<vmem>>, vector<1x8x32xf32>
    %115 = vector.shape_cast %114 : vector<1x8x32xf32> to vector<8x32xf32>
    %116 = vector.shape_cast %113 : vector<8x32xf32> to vector<1x8x32xf32>
    tpu.vector_store %arg10[%c0_43, %c0_44, %c0_45], %116 {strides = array<i32>} : memref<1x8x32xf32, #tpu.memory_space<vmem>>, vector<1x8x32xf32>,
    return
  }
  func.func @transform_0(%arg0: i32) -> (i32, i32, i32) {
    %c0_i32 = arith.constant 0 : i32
    %c0_i32_0 = arith.constant 0 : i32
    %c0_i32_1 = arith.constant 0 : i32
    return %arg0, %c0_i32, %c0_i32_0 : i32, i32, i32
  }
  func.func @transform_1(%arg0: i32) -> (i32, i32, i32) {
    %c0_i32 = arith.constant 0 : i32
    %c0_i32_0 = arith.constant 0 : i32
    %c0_i32_1 = arith.constant 0 : i32
    return %arg0, %c0_i32, %c0_i32_0 : i32, i32, i32
  }
  func.func @transform_2(%arg0: i32) -> (i32, i32, i32) {
    %c0_i32 = arith.constant 0 : i32
    %c0_i32_0 = arith.constant 0 : i32
    %c0_i32_1 = arith.constant 0 : i32
    %c0_i32_2 = arith.constant 0 : i32
    return %c0_i32, %c0_i32_0, %c0_i32_1 : i32, i32, i32
  }
  func.func @transform_3(%arg0: i32) -> (i32, i32, i32) {
    %c0_i32 = arith.constant 0 : i32
    %c0_i32_0 = arith.constant 0 : i32
    %c0_i32_1 = arith.constant 0 : i32
    %c0_i32_2 = arith.constant 0 : i32
    return %c0_i32, %c0_i32_0, %c0_i32_1 : i32, i32, i32
  }
  func.func @transform_4(%arg0: i32) -> (i32, i32, i32) {
    %c0_i32 = arith.constant 0 : i32
    %c0_i32_0 = arith.constant 0 : i32
    %c0_i32_1 = arith.constant 0 : i32
    %c0_i32_2 = arith.constant 0 : i32
    return %c0_i32, %c0_i32_0, %c0_i32_1 : i32, i32, i32
  }
  func.func @transform_5(%arg0: i32) -> (i32, i32) {
    %c0_i32 = arith.constant 0 : i32
    %c0_i32_0 = arith.constant 0 : i32
    %c0_i32_1 = arith.constant 0 : i32
    return %c0_i32, %c0_i32_0 : i32, i32
  }
  func.func @transform_6(%arg0: i32) -> (i32, i32) {
    %c0_i32 = arith.constant 0 : i32
    %c0_i32_0 = arith.constant 0 : i32
    %c0_i32_1 = arith.constant 0 : i32
    return %c0_i32, %c0_i32_0 : i32, i32
  }
  func.func @transform_7(%arg0: i32) -> (i32, i32) {
    %c0_i32 = arith.constant 0 : i32
    %c0_i32_0 = arith.constant 0 : i32
    %c0_i32_1 = arith.constant 0 : i32
    return %c0_i32, %c0_i32_0 : i32, i32
  }
  func.func @transform_8(%arg0: i32) -> (i32, i32) {
    %c0_i32 = arith.constant 0 : i32
    %c0_i32_0 = arith.constant 0 : i32
    %c0_i32_1 = arith.constant 0 : i32
    return %c0_i32, %c0_i32_0 : i32, i32
  }
  func.func @transform_9(%arg0: i32) -> (i32, i32, i32) {
    %c0_i32 = arith.constant 0 : i32
    %c0_i32_0 = arith.constant 0 : i32
    %c0_i32_1 = arith.constant 0 : i32
    return %arg0, %c0_i32, %c0_i32_0 : i32, i32, i32
  }
}

</mosaic_0001>

<llo_original>
// kernel: tpu_custom_call.1
$region0: #{tpu_custom_call.1}
  #allocation0 [shape = 'u32[]', space=smem, size = 0x4, offset = 0x4, fixed_abs, tag = 'smem constant byte address 0x4 - core index']
  #allocation1 [shape = 'u32[144,128]{1,0:T(1,128)}', space=vmem, size = 0x12000, scoped, tag = 'internal scratch']
  %s0 = inlined_call_operand.vmem [shape: f32[2,8,32], index: 0, kind: input, shape index: {}]
  %s1 = inlined_call_operand.vmem [shape: s8[2,8,8], index: 1, kind: input, shape index: {}]
  %s2 = inlined_call_operand.vmem [shape: bf16[4,32,24], index: 2, kind: input, shape index: {}]
  %s3 = inlined_call_operand.vmem [shape: f32[4,1,24], index: 3, kind: input, shape index: {}]
  %s4 = inlined_call_operand.vmem [shape: bf16[4,8,32], index: 4, kind: input, shape index: {}]
  %s5 = inlined_call_operand.vmem [shape: bf16[32,128], index: 5, kind: input, shape index: {}]
  %s6 = inlined_call_operand.vmem [shape: f32[1,128], index: 6, kind: input, shape index: {}]
  %s7 = inlined_call_operand.vmem [shape: bf16[128,32], index: 7, kind: input, shape index: {}]
  %s8 = inlined_call_operand.vmem [shape: f32[6,32], index: 8, kind: input, shape index: {}]
  %s9 = inlined_call_operand.hbm [shape: f32[2,8,32], index: 9, kind: output, shape index: {}]
  %s10 = sld [smem:[#allocation0]]
  $region69: #{tpu_custom_call.1} parent=0
    _
  %s12 = ssub.s32 1, %s10
  %s13 = scalar_select 0, %s12, %s10
  $region1: #{tpu_custom_call.1} parent=0
    #allocation2 [shape = 'u8[8192]{0}', space=vmem, size = 0x2000, scoped, tag = 'output window, operand 0']
    #allocation3 [shape = 's32[2]{0}', space=sflag, size = 0x8, scoped, tag = 'scoped memory for tpu_custom_call.1']
    %14 = vsyncpa [#allocation3], 0
    %s15 = scalar_lea.sflag [#allocation3], 1
    %16 = vsyncpa %s15, 0
    loop: start=0, step=1, limit=4
    $region2: #{tpu_custom_call.1} parent=1 // loop_pre_header
      _
    $region3: #{tpu_custom_call.1} parent=1 // loop_header
      %s18 = sphi 0, %s22
      %p19 = scmp.ge.s32.totalorder %s18, 4
      %s28 = sphi 0, %s30
      %s31 = sphi 0, %s28
      %s32 = sphi 0, %s31
      %s48 = sphi 0, %s32
      %s54 = sphi 0, %s56
      %s57 = sphi 0, %s54
      %s58 = sphi 0, %s57
      %s74 = sphi 0, %s58
      %s78 = sphi 0, %s78
      %s80 = sphi 0, %s78
      %s81 = sphi 0, %s80
      %s95 = sphi 0, %s81
      %s99 = sphi 0, %s99
      %s101 = sphi 0, %s99
      %s102 = sphi 0, %s101
      %s116 = sphi 0, %s102
      %s120 = sphi 0, %s120
      %s122 = sphi 0, %s120
      %s123 = sphi 0, %s122
      %s137 = sphi 0, %s123
      %s141 = sphi 0, %s141
      %s143 = sphi 0, %s141
      %s144 = sphi 0, %s143
      %s158 = sphi 0, %s144
      %s162 = sphi 0, %s162
      %s164 = sphi 0, %s162
      %s165 = sphi 0, %s164
      %s179 = sphi 0, %s165
      %s183 = sphi 0, %s183
      %s185 = sphi 0, %s183
      %s186 = sphi 0, %s185
      %s200 = sphi 0, %s186
      %s204 = sphi 0, %s204
      %s206 = sphi 0, %s204
      %s207 = sphi 0, %s206
      %s221 = sphi 0, %s207
      %s227 = sphi 0, %s229
      %s230 = sphi 0, %s227
      %s231 = sphi 0, %s230
      %s247 = sphi 0, %s231
    $region4: #{tpu_custom_call.1} parent=1 // loop_header_branch
      %21 = sbr.rel (%p19) target = $region8
    $region5: #{tpu_custom_call.1} parent=1 // loop_body
      %s23 = ssub.s32 %s18, 1
      %s24 = ssub.s32 %s18, 2
      %s25 = sadd.s32 %s18, 1
      %s26 = ssub.s32 %s18, %s25
      %p27 = scmp.eq.s32.totalorder %s26, 0
      %s29 = sadd.s32 %s28, 1
      %s30 = scalar_select %p27, %s28, %s29
      %p33 = pneg %p27
      %p34 = scmp.eq.s32.totalorder %s18, 1
      %p35 = por %p33, %p34
      %p36 = scmp.ne.s32.totalorder %s28, %s31
      %p37 = scmp.eq.s32.totalorder %s18, 0
      %p38 = por %p36, %p37
      %p39 = scmp.ne.s32.totalorder %s28, %s31
      %p40 = scmp.eq.s32.totalorder %s23, 1
      %p41 = por %p39, %p40
      %p42 = scmp.ne.s32.totalorder %s31, %s32
      %p43 = scmp.eq.s32.totalorder %s23, 0
      %p44 = por %p42, %p43
      %p45 = scmp.ne.s32.totalorder %s31, %s32
      %p46 = scmp.eq.s32.totalorder %s24, 1
      %p47 = por %p45, %p46
      %p49 = scmp.ne.s32.totalorder %s32, %s48
      %p50 = scmp.eq.s32.totalorder %s24, 0
      %p51 = por %p49, %p50
      %s52 = ssub.s32 %s18, %s25
      %p53 = scmp.eq.s32.totalorder %s52, 0
      %s55 = sadd.s32 %s54, 1
      %s56 = scalar_select %p53, %s54, %s55
      %p59 = pneg %p53
      %p60 = scmp.eq.s32.totalorder %s18, 1
      %p61 = por %p59, %p60
      %p62 = scmp.ne.s32.totalorder %s54, %s57
      %p63 = scmp.eq.s32.totalorder %s18, 0
      %p64 = por %p62, %p63
      %p65 = scmp.ne.s32.totalorder %s54, %s57
      %p66 = scmp.eq.s32.totalorder %s23, 1
      %p67 = por %p65, %p66
      %p68 = scmp.ne.s32.totalorder %s57, %s58
      %p69 = scmp.eq.s32.totalorder %s23, 0
      %p70 = por %p68, %p69
      %p71 = scmp.ne.s32.totalorder %s57, %s58
      %p72 = scmp.eq.s32.totalorder %s24, 1
      %p73 = por %p71, %p72
      %p75 = scmp.ne.s32.totalorder %s58, %s74
      %p76 = scmp.eq.s32.totalorder %s24, 0
      %p77 = por %p75, %p76
      %s79 = sadd.s32 %s78, 1
      %p82 = scmp.eq.s32.totalorder %s18, 1
      %p83 = scmp.ne.s32.totalorder %s78, %s80
      %p84 = scmp.eq.s32.totalorder %s18, 0
      %p85 = por %p83, %p84
      %p86 = scmp.ne.s32.totalorder %s78, %s80
      %p87 = scmp.eq.s32.totalorder %s23, 1
      %p88 = por %p86, %p87
      %p89 = scmp.ne.s32.totalorder %s80, %s81
      %p90 = scmp.eq.s32.totalorder %s23, 0
      %p91 = por %p89, %p90
      %p92 = scmp.ne.s32.totalorder %s80, %s81
      %p93 = scmp.eq.s32.totalorder %s24, 1
      %p94 = por %p92, %p93
      %p96 = scmp.ne.s32.totalorder %s81, %s95
      %p97 = scmp.eq.s32.totalorder %s24, 0
      %p98 = por %p96, %p97
      %s100 = sadd.s32 %s99, 1
      %p103 = scmp.eq.s32.totalorder %s18, 1
      %p104 = scmp.ne.s32.totalorder %s99, %s101
      %p105 = scmp.eq.s32.totalorder %s18, 0
      %p106 = por %p104, %p105
      %p107 = scmp.ne.s32.totalorder %s99, %s101
      %p108 = scmp.eq.s32.totalorder %s23, 1
      %p109 = por %p107, %p108
      %p110 = scmp.ne.s32.totalorder %s101, %s102
      %p111 = scmp.eq.s32.totalorder %s23, 0
      %p112 = por %p110, %p111
      %p113 = scmp.ne.s32.totalorder %s101, %s102
      %p114 = scmp.eq.s32.totalorder %s24, 1
      %p115 = por %p113, %p114
      %p117 = scmp.ne.s32.totalorder %s102, %s116
      %p118 = scmp.eq.s32.totalorder %s24, 0
      %p119 = por %p117, %p118
      %s121 = sadd.s32 %s120, 1
      %p124 = scmp.eq.s32.totalorder %s18, 1
      %p125 = scmp.ne.s32.totalorder %s120, %s122
      %p126 = scmp.eq.s32.totalorder %s18, 0
      %p127 = por %p125, %p126
      %p128 = scmp.ne.s32.totalorder %s120, %s122
      %p129 = scmp.eq.s32.totalorder %s23, 1
      %p130 = por %p128, %p129
      %p131 = scmp.ne.s32.totalorder %s122, %s123
      %p132 = scmp.eq.s32.totalorder %s23, 0
      %p133 = por %p131, %p132
      %p134 = scmp.ne.s32.totalorder %s122, %s123
      %p135 = scmp.eq.s32.totalorder %s24, 1
      %p136 = por %p134, %p135
      %p138 = scmp.ne.s32.totalorder %s123, %s137
      %p139 = scmp.eq.s32.totalorder %s24, 0
      %p140 = por %p138, %p139
      %s142 = sadd.s32 %s141, 1
      %p145 = scmp.eq.s32.totalorder %s18, 1
      %p146 = scmp.ne.s32.totalorder %s141, %s143
      %p147 = scmp.eq.s32.totalorder %s18, 0
      %p148 = por %p146, %p147
      %p149 = scmp.ne.s32.totalorder %s141, %s143
      %p150 = scmp.eq.s32.totalorder %s23, 1
      %p151 = por %p149, %p150
      %p152 = scmp.ne.s32.totalorder %s143, %s144
      %p153 = scmp.eq.s32.totalorder %s23, 0
      %p154 = por %p152, %p153
      %p155 = scmp.ne.s32.totalorder %s143, %s144
      %p156 = scmp.eq.s32.totalorder %s24, 1
      %p157 = por %p155, %p156
      %p159 = scmp.ne.s32.totalorder %s144, %s158
      %p160 = scmp.eq.s32.totalorder %s24, 0
      %p161 = por %p159, %p160
      %s163 = sadd.s32 %s162, 1
      %p166 = scmp.eq.s32.totalorder %s18, 1
      %p167 = scmp.ne.s32.totalorder %s162, %s164
      %p168 = scmp.eq.s32.totalorder %s18, 0
      %p169 = por %p167, %p168
      %p170 = scmp.ne.s32.totalorder %s162, %s164
      %p171 = scmp.eq.s32.totalorder %s23, 1
      %p172 = por %p170, %p171
      %p173 = scmp.ne.s32.totalorder %s164, %s165
      %p174 = scmp.eq.s32.totalorder %s23, 0
      %p175 = por %p173, %p174
      %p176 = scmp.ne.s32.totalorder %s164, %s165
      %p177 = scmp.eq.s32.totalorder %s24, 1
      %p178 = por %p176, %p177
      %p180 = scmp.ne.s32.totalorder %s165, %s179
      %p181 = scmp.eq.s32.totalorder %s24, 0
      %p182 = por %p180, %p181
      %s184 = sadd.s32 %s183, 1
      %p187 = scmp.eq.s32.totalorder %s18, 1
      %p188 = scmp.ne.s32.totalorder %s183, %s185
      %p189 = scmp.eq.s32.totalorder %s18, 0
      %p190 = por %p188, %p189
      %p191 = scmp.ne.s32.totalorder %s183, %s185
      %p192 = scmp.eq.s32.totalorder %s23, 1
      %p193 = por %p191, %p192
      %p194 = scmp.ne.s32.totalorder %s185, %s186
      %p195 = scmp.eq.s32.totalorder %s23, 0
      %p196 = por %p194, %p195
      %p197 = scmp.ne.s32.totalorder %s185, %s186
      %p198 = scmp.eq.s32.totalorder %s24, 1
      %p199 = por %p197, %p198
      %p201 = scmp.ne.s32.totalorder %s186, %s200
      %p202 = scmp.eq.s32.totalorder %s24, 0
      %p203 = por %p201, %p202
      %s205 = sadd.s32 %s204, 1
      %p208 = scmp.eq.s32.totalorder %s18, 1
      %p209 = scmp.ne.s32.totalorder %s204, %s206
      %p210 = scmp.eq.s32.totalorder %s18, 0
      %p211 = por %p209, %p210
      %p212 = scmp.ne.s32.totalorder %s204, %s206
      %p213 = scmp.eq.s32.totalorder %s23, 1
      %p214 = por %p212, %p213
      %p215 = scmp.ne.s32.totalorder %s206, %s207
      %p216 = scmp.eq.s32.totalorder %s23, 0
      %p217 = por %p215, %p216
      %p218 = scmp.ne.s32.totalorder %s206, %s207
      %p219 = scmp.eq.s32.totalorder %s24, 1
      %p220 = por %p218, %p219
      %p222 = scmp.ne.s32.totalorder %s207, %s221
      %p223 = scmp.eq.s32.totalorder %s24, 0
      %p224 = por %p222, %p223
      %s225 = ssub.s32 %s18, %s25
      %p226 = scmp.eq.s32.totalorder %s225, 0
      %s228 = sadd.s32 %s227, 1
      %s229 = scalar_select %p226, %s227, %s228
      %p232 = pneg %p226
      %p233 = scmp.eq.s32.totalorder %s18, 1
      %p234 = por %p232, %p233
      %p235 = scmp.ne.s32.totalorder %s227, %s230
      %p236 = scmp.eq.s32.totalorder %s18, 0
      %p237 = por %p235, %p236
      %p238 = scmp.ne.s32.totalorder %s227, %s230
      %p239 = scmp.eq.s32.totalorder %s23, 1
      %p240 = por %p238, %p239
      %p241 = scmp.ne.s32.totalorder %s230, %s231
      %p242 = scmp.eq.s32.totalorder %s23, 0
      %p243 = por %p241, %p242
      %p244 = scmp.ne.s32.totalorder %s230, %s231
      %p245 = scmp.eq.s32.totalorder %s24, 1
      %p246 = por %p244, %p245
      %p248 = scmp.ne.s32.totalorder %s231, %s247
      %p249 = scmp.eq.s32.totalorder %s24, 0
      %p250 = por %p248, %p249
      %p251 = scmp.le.s32.totalorder 1, %s18
      %p252 = scmp.lt.s32.totalorder %s18, 3
      %p253 = pnand %p251, %p252
      %p254 = pneg %p253
      // Predicated region
      $region9: #{tpu_custom_call.1} parent=5 // pred_check
        _
      $region10: #{tpu_custom_call.1} parent=5 // pred_check_branch
        %256 = sbr.rel (%p253) target = $region12
      $region11: #{tpu_custom_call.1} parent=5 // pred_region
        %s257 = ssub.s32 %s18, 1
        // Predicated region
        $region13: #{tpu_custom_call.1} parent=11 // pred_check
          %p258 = pneg %p91
        $region14: #{tpu_custom_call.1} parent=11 // pred_check_branch
          %260 = sbr.rel (%p258) target = $region16
        $region15: #{tpu_custom_call.1} parent=11 // pred_region
          _
        $region16: #{tpu_custom_call.1} parent=11 // pred_fallthru
          _
        // Predicated region
        $region17: #{tpu_custom_call.1} parent=11 // pred_check
          %p261 = pneg %p112
        $region18: #{tpu_custom_call.1} parent=11 // pred_check_branch
          %263 = sbr.rel (%p261) target = $region20
        $region19: #{tpu_custom_call.1} parent=11 // pred_region
          _
        $region20: #{tpu_custom_call.1} parent=11 // pred_fallthru
          _
        // Predicated region
        $region21: #{tpu_custom_call.1} parent=11 // pred_check
          %p264 = pneg %p133
        $region22: #{tpu_custom_call.1} parent=11 // pred_check_branch
          %266 = sbr.rel (%p264) target = $region24
        $region23: #{tpu_custom_call.1} parent=11 // pred_region
          _
        $region24: #{tpu_custom_call.1} parent=11 // pred_fallthru
          _
        // Predicated region
        $region25: #{tpu_custom_call.1} parent=11 // pred_check
          %p267 = pneg %p154
        $region26: #{tpu_custom_call.1} parent=11 // pred_check_branch
          %269 = sbr.rel (%p267) target = $region28
        $region27: #{tpu_custom_call.1} parent=11 // pred_region
          _
        $region28: #{tpu_custom_call.1} parent=11 // pred_fallthru
          _
        // Predicated region
        $region29: #{tpu_custom_call.1} parent=11 // pred_check
          %p270 = pneg %p175
        $region30: #{tpu_custom_call.1} parent=11 // pred_check_branch
          %272 = sbr.rel (%p270) target = $region32
        $region31: #{tpu_custom_call.1} parent=11 // pred_region
          _
        $region32: #{tpu_custom_call.1} parent=11 // pred_fallthru
          _
        // Predicated region
        $region33: #{tpu_custom_call.1} parent=11 // pred_check
          %p273 = pneg %p196
        $region34: #{tpu_custom_call.1} parent=11 // pred_check_branch
          %275 = sbr.rel (%p273) target = $region36
        $region35: #{tpu_custom_call.1} parent=11 // pred_region
          _
        $region36: #{tpu_custom_call.1} parent=11 // pred_fallthru
          _
        // Predicated region
        $region37: #{tpu_custom_call.1} parent=11 // pred_check
          %p276 = pneg %p217
        $region38: #{tpu_custom_call.1} parent=11 // pred_check_branch
          %278 = sbr.rel (%p276) target = $region40
        $region39: #{tpu_custom_call.1} parent=11 // pred_region
          _
        $region40: #{tpu_custom_call.1} parent=11 // pred_fallthru
          _
      $region12: #{tpu_custom_call.1} parent=5 // pred_fallthru
        _
      %p279 = scmp.lt.s32.totalorder %s18, 2
      // Predicated region
      $region41: #{tpu_custom_call.1} parent=5 // pred_check
        %p280 = pneg %p279
      $region42: #{tpu_custom_call.1} parent=5 // pred_check_branch
        %282 = sbr.rel (%p280) target = $region44
      $region43: #{tpu_custom_call.1} parent=5 // pred_region
        // Predicated region
        $region45: #{tpu_custom_call.1} parent=43 // pred_check
          %p283 = pneg %p38
        $region46: #{tpu_custom_call.1} parent=43 // pred_check_branch
          %285 = sbr.rel (%p283) target = $region48
        $region47: #{tpu_custom_call.1} parent=43 // pred_region
          %p286 = scmp.lt.s32.totalorder %s18, 1
          %s287 = scalar_select %p286, %s18, 1
          %s288 = smul.addr %s287, 8
          %s289 = scalar_lea.vmem %s0, %s288
        $region48: #{tpu_custom_call.1} parent=43 // pred_fallthru
          _
        // Predicated region
        $region49: #{tpu_custom_call.1} parent=43 // pred_check
          %p290 = pneg %p64
        $region50: #{tpu_custom_call.1} parent=43 // pred_check_branch
          %292 = sbr.rel (%p290) target = $region52
        $region51: #{tpu_custom_call.1} parent=43 // pred_region
          %p293 = scmp.lt.s32.totalorder %s18, 1
          %s294 = scalar_select %p293, %s18, 1
          %s295 = smul.addr %s294, 2
          %s296 = scalar_lea.vmem %s1, %s295
        $region52: #{tpu_custom_call.1} parent=43 // pred_fallthru
          _
      $region44: #{tpu_custom_call.1} parent=5 // pred_fallthru
        _
      %p297 = scmp.le.s32.totalorder 1, %s18
      %p298 = scmp.lt.s32.totalorder %s18, 3
      %p299 = pnand %p297, %p298
      %p300 = pneg %p299
      // Predicated region
      $region53: #{tpu_custom_call.1} parent=5 // pred_check
        _
      $region54: #{tpu_custom_call.1} parent=5 // pred_check_branch
        %302 = sbr.rel (%p299) target = $region56
      $region55: #{tpu_custom_call.1} parent=5 // pred_region
        %s303 = ssub.s32 %s18, 1
        %p304 = scmp.lt.s32.totalorder %s23, 1
        %s305 = scalar_select %p304, %s23, 1
        %s306 = smul.addr %s305, 8
        %s307 = scalar_lea.vmem %s0, %s306
        %p308 = pneg %p44
        %p309 = pneg %p41
        %p310 = scmp.lt.s32.totalorder %s23, 1
        %s311 = scalar_select %p310, %s23, 1
        %s312 = smul.addr %s311, 2
        %s313 = scalar_lea.vmem %s1, %s312
        %p314 = pneg %p70
        %p315 = pneg %p67
        %p316 = pneg %p91
        %p317 = pneg %p88
        %p318 = pneg %p112
        %p319 = pneg %p109
        %p320 = pneg %p133
        %p321 = pneg %p130
        %p322 = pneg %p154
        %p323 = pneg %p151
        %p324 = pneg %p175
        %p325 = pneg %p172
        %p326 = pneg %p196
        %p327 = pneg %p193
        %p328 = pneg %p217
        %p329 = pneg %p214
        %p330 = pneg %p243
        %p331 = pneg %p240
        %s332 = sand.u32 %s230, 1
        %s333 = scalar_lea.sflag [#allocation3], %s332
        %s334 = sand.u32 %s230, 1
        %s335 = smul.addr %s334, 8
        %s336 = scalar_lea.vmem [#allocation2], %s335
        %p337 = scmp.lt.s32.totalorder %s23, 1
        %s338 = scalar_select %p337, %s23, 1
        %s339 = smul.addr %s338, 8
        %s340 = scalar_lea.vmem %s0, %s339
        %p341 = scmp.lt.s32.totalorder %s23, 1
        %s342 = scalar_select %p341, %s23, 1
        %s343 = smul.addr %s342, 2
        %s344 = scalar_lea.vmem %s1, %s343
        %v346 = vld [vmem:[%s340] sm:$0xff]
        %v347 = vld [vmem:[%s8] sm:$0x3f]
        %v348 = vpack.c.bf16 %v346, %v346
        %v349 = vld [vmem:[%s2] sm:$0xf]
        %v350 = vld [vmem:[%s2 + $0x4] sm:$0xf]
        %v351 = vld [vmem:[%s2 + $0x8] sm:$0xf]
        %v352 = vld [vmem:[%s2 + $0xc] sm:$0xf]
        %v353 = vld [vmem:[%s2 + $0x10] sm:$0xf]
        %v354 = vld [vmem:[%s2 + $0x14] sm:$0xf]
        %v355 = vld [vmem:[%s2 + $0x18] sm:$0xf]
        %v356 = vld [vmem:[%s2 + $0x1c] sm:$0xf]
        %v357 = vld [vmem:[%s2 + $0x20] sm:$0xf]
        %v358 = vld [vmem:[%s2 + $0x24] sm:$0xf]
        %v359 = vld [vmem:[%s2 + $0x28] sm:$0xf]
        %v360 = vld [vmem:[%s2 + $0x2c] sm:$0xf]
        %v361 = vld [vmem:[%s2 + $0x30] sm:$0xf]
        %v362 = vld [vmem:[%s2 + $0x34] sm:$0xf]
        %v363 = vld [vmem:[%s2 + $0x38] sm:$0xf]
        %v364 = vld [vmem:[%s2 + $0x3c] sm:$0xf]
        %v365 = vld [vmem:[%s3] sm:$0x1]
        %v366 = vld [vmem:[%s3 + $0x1] sm:$0x1]
        %v367 = vld [vmem:[%s3 + $0x2] sm:$0x1]
        %v368 = vld [vmem:[%s3 + $0x3] sm:$0x1]
        %v373 = vlaneseq
        %v374 = vshrl.u32 %v373, 7
        %v375 = vsub.s32 0, %v374
        %v376 = vrot.slane %v365, %v375
        %v377 = vlaneseq
        %v378 = vshrl.u32 %v377, 7
        %v379 = vsub.s32 0, %v378
        %v380 = vrot.slane %v366, %v379
        %v381 = vlaneseq
        %v382 = vshrl.u32 %v381, 7
        %v383 = vsub.s32 0, %v382
        %v384 = vrot.slane %v367, %v383
        %v385 = vlaneseq
        %v386 = vshrl.u32 %v385, 7
        %v387 = vsub.s32 0, %v386
        %v388 = vrot.slane %v368, %v387
        %v397 = vunpack.c.l.b16 %v349
        %v398 = vunpack.c.l.b16 %v350
        %v399 = vunpack.c.l.b16 %v351
        %v400 = vunpack.c.l.b16 %v352
        %v401 = vpack.c.b16 %v398, %v397
        %v402 = vpack.c.b16 %v400, %v399
        %vm405 = vcmask 261120
        %v407 = vsel %vm405, %v348, 0
        %409 = vmatprep.subr.bf16.mxu0 0
        %410 = vmatpush1.bf16.msra.mxu0 %v401
        %411 = vmatprep.subr.bf16.mxu0 0
        %412 = vmatpush1.bf16.msra.mxu0 %v402
        %413 = vmatprep.subr.bf16.mxu0 0
        %414 = vmatpush1.bf16.msra.mxu0 0
        %415 = vmatprep.subr.bf16.mxu0 0
        %416 = vmatpush1.bf16.msra.mxu0 0
        %417 = vmatprep.subr.bf16.mxu0 0
        %418 = vmatpush1.bf16.msra.mxu0 0
        %419 = vmatprep.subr.bf16.mxu0 0
        %420 = vmatpush1.bf16.msra.mxu0 0
        %421 = vmatprep.subr.bf16.mxu0 0
        %422 = vmatpush1.bf16.msra.mxu0 0
        %423 = vmatprep.subr.bf16.mxu0 0
        %424 = vmatpush1.bf16.msra.mxu0 0
        %425 = vmatprep.subr.bf16.mxu0 0
        %426 = vmatpush1.bf16.msra.mxu0 0
        %427 = vmatprep.subr.bf16.mxu0 0
        %428 = vmatpush1.bf16.msra.mxu0 0
        %429 = vmatprep.subr.bf16.mxu0 0
        %430 = vmatpush1.bf16.msra.mxu0 0
        %431 = vmatprep.subr.bf16.mxu0 0
        %432 = vmatpush1.bf16.msra.mxu0 0
        %433 = vmatprep.subr.bf16.mxu0 0
        %434 = vmatpush1.bf16.msra.mxu0 0
        %435 = vmatprep.subr.bf16.mxu0 0
        %436 = vmatpush1.bf16.msra.mxu0 0
        %437 = vmatprep.subr.bf16.mxu0 0
        %438 = vmatpush1.bf16.msra.mxu0 0
        %439 = vmatprep.subr.bf16.mxu0 0
        %440 = vmatpush1.bf16.msra.mxu0 0
        %441 = vmatprep.mubr.bf16.mxu0 0
        %442 = vmatmul.mubr.bf16.gmra.mrb[0].mxu0 %v407
        %v443 = vpop.f32.mrb[0].mxu0
        %v444 = vadd.f32 %v376, %v443
        %v445 = vpop.f32.mrb[0].mxu0
        %v446 = vpop.f32.mrb[0].mxu0
        %v447 = vpop.f32.mrb[0].mxu0
        %448 = vdwg.mxu0
        %v453 = vunpack.c.l.b16 %v353
        %v454 = vunpack.c.l.b16 %v354
        %v455 = vunpack.c.l.b16 %v355
        %v456 = vunpack.c.l.b16 %v356
        %v457 = vpack.c.b16 %v454, %v453
        %v458 = vpack.c.b16 %v456, %v455
        %461 = vmatprep.subr.bf16.mxu0 0
        %462 = vmatpush1.bf16.msra.mxu0 %v457
        %463 = vmatprep.subr.bf16.mxu0 0
        %464 = vmatpush1.bf16.msra.mxu0 %v458
        %465 = vmatprep.subr.bf16.mxu0 0
        %466 = vmatpush1.bf16.msra.mxu0 0
        %467 = vmatprep.subr.bf16.mxu0 0
        %468 = vmatpush1.bf16.msra.mxu0 0
        %469 = vmatprep.subr.bf16.mxu0 0
        %470 = vmatpush1.bf16.msra.mxu0 0
        %471 = vmatprep.subr.bf16.mxu0 0
        %472 = vmatpush1.bf16.msra.mxu0 0
        %473 = vmatprep.subr.bf16.mxu0 0
        %474 = vmatpush1.bf16.msra.mxu0 0
        %475 = vmatprep.subr.bf16.mxu0 0
        %476 = vmatpush1.bf16.msra.mxu0 0
        %477 = vmatprep.subr.bf16.mxu0 0
        %478 = vmatpush1.bf16.msra.mxu0 0
        %479 = vmatprep.subr.bf16.mxu0 0
        %480 = vmatpush1.bf16.msra.mxu0 0
        %481 = vmatprep.subr.bf16.mxu0 0
        %482 = vmatpush1.bf16.msra.mxu0 0
        %483 = vmatprep.subr.bf16.mxu0 0
        %484 = vmatpush1.bf16.msra.mxu0 0
        %485 = vmatprep.subr.bf16.mxu0 0
        %486 = vmatpush1.bf16.msra.mxu0 0
        %487 = vmatprep.subr.bf16.mxu0 0
        %488 = vmatpush1.bf16.msra.mxu0 0
        %489 = vmatprep.subr.bf16.mxu0 0
        %490 = vmatpush1.bf16.msra.mxu0 0
        %491 = vmatprep.subr.bf16.mxu0 0
        %492 = vmatpush1.bf16.msra.mxu0 0
        %493 = vmatprep.mubr.bf16.mxu0 0
        %494 = vmatmul.mubr.bf16.gmra.mrb[0].mxu0 %v407
        %v495 = vpop.f32.mrb[0].mxu0
        %v496 = vadd.f32 %v380, %v495
        %v497 = vpop.f32.mrb[0].mxu0
        %v498 = vpop.f32.mrb[0].mxu0
        %v499 = vpop.f32.mrb[0].mxu0
        %500 = vdwg.mxu0
        %v505 = vunpack.c.l.b16 %v357
        %v506 = vunpack.c.l.b16 %v358
        %v507 = vunpack.c.l.b16 %v359
        %v508 = vunpack.c.l.b16 %v360
        %v509 = vpack.c.b16 %v506, %v505
        %v510 = vpack.c.b16 %v508, %v507
        %513 = vmatprep.subr.bf16.mxu0 0
        %514 = vmatpush1.bf16.msra.mxu0 %v509
        %515 = vmatprep.subr.bf16.mxu0 0
        %516 = vmatpush1.bf16.msra.mxu0 %v510
        %517 = vmatprep.subr.bf16.mxu0 0
        %518 = vmatpush1.bf16.msra.mxu0 0
        %519 = vmatprep.subr.bf16.mxu0 0
        %520 = vmatpush1.bf16.msra.mxu0 0
        %521 = vmatprep.subr.bf16.mxu0 0
        %522 = vmatpush1.bf16.msra.mxu0 0
        %523 = vmatprep.subr.bf16.mxu0 0
        %524 = vmatpush1.bf16.msra.mxu0 0
        %525 = vmatprep.subr.bf16.mxu0 0
        %526 = vmatpush1.bf16.msra.mxu0 0
        %527 = vmatprep.subr.bf16.mxu0 0
        %528 = vmatpush1.bf16.msra.mxu0 0
        %529 = vmatprep.subr.bf16.mxu0 0
        %530 = vmatpush1.bf16.msra.mxu0 0
        %531 = vmatprep.subr.bf16.mxu0 0
        %532 = vmatpush1.bf16.msra.mxu0 0
        %533 = vmatprep.subr.bf16.mxu0 0
        %534 = vmatpush1.bf16.msra.mxu0 0
        %535 = vmatprep.subr.bf16.mxu0 0
        %536 = vmatpush1.bf16.msra.mxu0 0
        %537 = vmatprep.subr.bf16.mxu0 0
        %538 = vmatpush1.bf16.msra.mxu0 0
        %539 = vmatprep.subr.bf16.mxu0 0
        %540 = vmatpush1.bf16.msra.mxu0 0
        %541 = vmatprep.subr.bf16.mxu0 0
        %542 = vmatpush1.bf16.msra.mxu0 0
        %543 = vmatprep.subr.bf16.mxu0 0
        %544 = vmatpush1.bf16.msra.mxu0 0
        %545 = vmatprep.mubr.bf16.mxu0 0
        %546 = vmatmul.mubr.bf16.gmra.mrb[0].mxu0 %v407
        %v547 = vpop.f32.mrb[0].mxu0
        %v548 = vadd.f32 %v384, %v547
        %v549 = vpop.f32.mrb[0].mxu0
        %v550 = vpop.f32.mrb[0].mxu0
        %v551 = vpop.f32.mrb[0].mxu0
        %552 = vdwg.mxu0
        %v557 = vunpack.c.l.b16 %v361
        %v558 = vunpack.c.l.b16 %v362
        %v559 = vunpack.c.l.b16 %v363
        %v560 = vunpack.c.l.b16 %v364
        %v561 = vpack.c.b16 %v558, %v557
        %v562 = vpack.c.b16 %v560, %v559
        %565 = vmatprep.subr.bf16.mxu0 0
        %566 = vmatpush1.bf16.msra.mxu0 %v561
        %567 = vmatprep.subr.bf16.mxu0 0
        %568 = vmatpush1.bf16.msra.mxu0 %v562
        %569 = vmatprep.subr.bf16.mxu0 0
        %570 = vmatpush1.bf16.msra.mxu0 0
        %571 = vmatprep.subr.bf16.mxu0 0
        %572 = vmatpush1.bf16.msra.mxu0 0
        %573 = vmatprep.subr.bf16.mxu0 0
        %574 = vmatpush1.bf16.msra.mxu0 0
        %575 = vmatprep.subr.bf16.mxu0 0
        %576 = vmatpush1.bf16.msra.mxu0 0
        %577 = vmatprep.subr.bf16.mxu0 0
        %578 = vmatpush1.bf16.msra.mxu0 0
        %579 = vmatprep.subr.bf16.mxu0 0
        %580 = vmatpush1.bf16.msra.mxu0 0
        %581 = vmatprep.subr.bf16.mxu0 0
        %582 = vmatpush1.bf16.msra.mxu0 0
        %583 = vmatprep.subr.bf16.mxu0 0
        %584 = vmatpush1.bf16.msra.mxu0 0
        %585 = vmatprep.subr.bf16.mxu0 0
        %586 = vmatpush1.bf16.msra.mxu0 0
        %587 = vmatprep.subr.bf16.mxu0 0
        %588 = vmatpush1.bf16.msra.mxu0 0
        %589 = vmatprep.subr.bf16.mxu0 0
        %590 = vmatpush1.bf16.msra.mxu0 0
        %591 = vmatprep.subr.bf16.mxu0 0
        %592 = vmatpush1.bf16.msra.mxu0 0
        %593 = vmatprep.subr.bf16.mxu0 0
        %594 = vmatpush1.bf16.msra.mxu0 0
        %595 = vmatprep.subr.bf16.mxu0 0
        %596 = vmatpush1.bf16.msra.mxu0 0
        %597 = vmatprep.mubr.bf16.mxu0 0
        %598 = vmatmul.mubr.bf16.gmra.mrb[0].mxu0 %v407
        %v599 = vpop.f32.mrb[0].mxu0
        %v600 = vadd.f32 %v388, %v599
        %v601 = vpop.f32.mrb[0].mxu0
        %v602 = vpop.f32.mrb[0].mxu0
        %v603 = vpop.f32.mrb[0].mxu0
        %604 = vdwg.mxu0
        %v605 = vmul.f32 %v444, 0.17677669
        %v606 = vmul.f32 %v496, 0.17677669
        %v607 = vmul.f32 %v548, 0.17677669
        %v608 = vmul.f32 %v600, 0.17677669
        %v609 = vpack.c.bf16 %v605, %v605
        %v610 = vpack.c.bf16 %v606, %v606
        %v611 = vpack.c.bf16 %v607, %v607
        %v612 = vpack.c.bf16 %v608, %v608
        %v613 = vpack.c.bf16 %v444, %v444
        %v614 = vpack.c.bf16 %v496, %v496
        %v615 = vpack.c.bf16 %v548, %v548
        %v616 = vpack.c.bf16 %v600, %v600
        %618 = vrot.lane.b32.xlu0 %v613, 120
        %v619 = vpop.permute.xlu0 %618
        %vm620 = vcmask 64512
        %v622 = vsel %vm620, %v609, 0
        %v625 = vsel %vm620, %v619, 0
        %627 = vmatprep.subr.bf16.mxu0 0
        %628 = vmatpush1.bf16.xpose.msra.mxu0 %v625
        %629 = vmatprep.subr.bf16.mxu0 0
        %630 = vmatpush1.bf16.xpose.msra.mxu0 0
        %631 = vmatprep.subr.bf16.mxu0 0
        %632 = vmatpush1.bf16.xpose.msra.mxu0 0
        %633 = vmatprep.subr.bf16.mxu0 0
        %634 = vmatpush1.bf16.xpose.msra.mxu0 0
        %635 = vmatprep.subr.bf16.mxu0 0
        %636 = vmatpush1.bf16.xpose.msra.mxu0 0
        %637 = vmatprep.subr.bf16.mxu0 0
        %638 = vmatpush1.bf16.xpose.msra.mxu0 0
        %639 = vmatprep.subr.bf16.mxu0 0
        %640 = vmatpush1.bf16.xpose.msra.mxu0 0
        %641 = vmatprep.subr.bf16.mxu0 0
        %642 = vmatpush1.bf16.xpose.msra.mxu0 0
        %643 = vmatprep.subr.bf16.mxu0 0
        %644 = vmatpush1.bf16.xpose.msra.mxu0 0
        %645 = vmatprep.subr.bf16.mxu0 0
        %646 = vmatpush1.bf16.xpose.msra.mxu0 0
        %647 = vmatprep.subr.bf16.mxu0 0
        %648 = vmatpush1.bf16.xpose.msra.mxu0 0
        %649 = vmatprep.subr.bf16.mxu0 0
        %650 = vmatpush1.bf16.xpose.msra.mxu0 0
        %651 = vmatprep.subr.bf16.mxu0 0
        %652 = vmatpush1.bf16.xpose.msra.mxu0 0
        %653 = vmatprep.subr.bf16.mxu0 0
        %654 = vmatpush1.bf16.xpose.msra.mxu0 0
        %655 = vmatprep.subr.bf16.mxu0 0
        %656 = vmatpush1.bf16.xpose.msra.mxu0 0
        %657 = vmatprep.subr.bf16.mxu0 0
        %658 = vmatpush1.bf16.xpose.msra.mxu0 0
        %659 = vmatprep.mubr.bf16.mxu0 0
        %660 = vmatmul.mubr.bf16.gmra.mrb[0].mxu0 %v622
        %v661 = vpop.f32.mrb[0].mxu0
        %v662 = vadd.f32 0.0, %v661
        %v663 = vpop.f32.mrb[0].mxu0
        %v664 = vpop.f32.mrb[0].mxu0
        %v665 = vpop.f32.mrb[0].mxu0
        %666 = vdwg.mxu0
        %668 = vrot.lane.b32.xlu0 %v614, 120
        %v669 = vpop.permute.xlu0 %668
        %v671 = vsel %vm620, %v610, 0
        %v674 = vsel %vm620, %v669, 0
        %676 = vmatprep.subr.bf16.mxu0 0
        %677 = vmatpush1.bf16.xpose.msra.mxu0 %v674
        %678 = vmatprep.subr.bf16.mxu0 0
        %679 = vmatpush1.bf16.xpose.msra.mxu0 0
        %680 = vmatprep.subr.bf16.mxu0 0
        %681 = vmatpush1.bf16.xpose.msra.mxu0 0
        %682 = vmatprep.subr.bf16.mxu0 0
        %683 = vmatpush1.bf16.xpose.msra.mxu0 0
        %684 = vmatprep.subr.bf16.mxu0 0
        %685 = vmatpush1.bf16.xpose.msra.mxu0 0
        %686 = vmatprep.subr.bf16.mxu0 0
        %687 = vmatpush1.bf16.xpose.msra.mxu0 0
        %688 = vmatprep.subr.bf16.mxu0 0
        %689 = vmatpush1.bf16.xpose.msra.mxu0 0
        %690 = vmatprep.subr.bf16.mxu0 0
        %691 = vmatpush1.bf16.xpose.msra.mxu0 0
        %692 = vmatprep.subr.bf16.mxu0 0
        %693 = vmatpush1.bf16.xpose.msra.mxu0 0
        %694 = vmatprep.subr.bf16.mxu0 0
        %695 = vmatpush1.bf16.xpose.msra.mxu0 0
        %696 = vmatprep.subr.bf16.mxu0 0
        %697 = vmatpush1.bf16.xpose.msra.mxu0 0
        %698 = vmatprep.subr.bf16.mxu0 0
        %699 = vmatpush1.bf16.xpose.msra.mxu0 0
        %700 = vmatprep.subr.bf16.mxu0 0
        %701 = vmatpush1.bf16.xpose.msra.mxu0 0
        %702 = vmatprep.subr.bf16.mxu0 0
        %703 = vmatpush1.bf16.xpose.msra.mxu0 0
        %704 = vmatprep.subr.bf16.mxu0 0
        %705 = vmatpush1.bf16.xpose.msra.mxu0 0
        %706 = vmatprep.subr.bf16.mxu0 0
        %707 = vmatpush1.bf16.xpose.msra.mxu0 0
        %708 = vmatprep.mubr.bf16.mxu0 0
        %709 = vmatmul.mubr.bf16.gmra.mrb[0].mxu0 %v671
        %v710 = vpop.f32.mrb[0].mxu0
        %v711 = vadd.f32 0.0, %v710
        %v712 = vpop.f32.mrb[0].mxu0
        %v713 = vpop.f32.mrb[0].mxu0
        %v714 = vpop.f32.mrb[0].mxu0
        %715 = vdwg.mxu0
        %717 = vrot.lane.b32.xlu0 %v615, 120
        %v718 = vpop.permute.xlu0 %717
        %v720 = vsel %vm620, %v611, 0
        %v723 = vsel %vm620, %v718, 0
        %725 = vmatprep.subr.bf16.mxu0 0
        %726 = vmatpush1.bf16.xpose.msra.mxu0 %v723
        %727 = vmatprep.subr.bf16.mxu0 0
        %728 = vmatpush1.bf16.xpose.msra.mxu0 0
        %729 = vmatprep.subr.bf16.mxu0 0
        %730 = vmatpush1.bf16.xpose.msra.mxu0 0
        %731 = vmatprep.subr.bf16.mxu0 0
        %732 = vmatpush1.bf16.xpose.msra.mxu0 0
        %733 = vmatprep.subr.bf16.mxu0 0
        %734 = vmatpush1.bf16.xpose.msra.mxu0 0
        %735 = vmatprep.subr.bf16.mxu0 0
        %736 = vmatpush1.bf16.xpose.msra.mxu0 0
        %737 = vmatprep.subr.bf16.mxu0 0
        %738 = vmatpush1.bf16.xpose.msra.mxu0 0
        %739 = vmatprep.subr.bf16.mxu0 0
        %740 = vmatpush1.bf16.xpose.msra.mxu0 0
        %741 = vmatprep.subr.bf16.mxu0 0
        %742 = vmatpush1.bf16.xpose.msra.mxu0 0
        %743 = vmatprep.subr.bf16.mxu0 0
        %744 = vmatpush1.bf16.xpose.msra.mxu0 0
        %745 = vmatprep.subr.bf16.mxu0 0
        %746 = vmatpush1.bf16.xpose.msra.mxu0 0
        %747 = vmatprep.subr.bf16.mxu0 0
        %748 = vmatpush1.bf16.xpose.msra.mxu0 0
        %749 = vmatprep.subr.bf16.mxu0 0
        %750 = vmatpush1.bf16.xpose.msra.mxu0 0
        %751 = vmatprep.subr.bf16.mxu0 0
        %752 = vmatpush1.bf16.xpose.msra.mxu0 0
        %753 = vmatprep.subr.bf16.mxu0 0
        %754 = vmatpush1.bf16.xpose.msra.mxu0 0
        %755 = vmatprep.subr.bf16.mxu0 0
        %756 = vmatpush1.bf16.xpose.msra.mxu0 0
        %757 = vmatprep.mubr.bf16.mxu0 0
        %758 = vmatmul.mubr.bf16.gmra.mrb[0].mxu0 %v720
        %v759 = vpop.f32.mrb[0].mxu0
        %v760 = vadd.f32 0.0, %v759
        %v761 = vpop.f32.mrb[0].mxu0
        %v762 = vpop.f32.mrb[0].mxu0
        %v763 = vpop.f32.mrb[0].mxu0
        %764 = vdwg.mxu0
        %766 = vrot.lane.b32.xlu0 %v616, 120
        %v767 = vpop.permute.xlu0 %766
        %v769 = vsel %vm620, %v612, 0
        %v772 = vsel %vm620, %v767, 0
        %774 = vmatprep.subr.bf16.mxu0 0
        %775 = vmatpush1.bf16.xpose.msra.mxu0 %v772
        %776 = vmatprep.subr.bf16.mxu0 0
        %777 = vmatpush1.bf16.xpose.msra.mxu0 0
        %778 = vmatprep.subr.bf16.mxu0 0
        %779 = vmatpush1.bf16.xpose.msra.mxu0 0
        %780 = vmatprep.subr.bf16.mxu0 0
        %781 = vmatpush1.bf16.xpose.msra.mxu0 0
        %782 = vmatprep.subr.bf16.mxu0 0
        %783 = vmatpush1.bf16.xpose.msra.mxu0 0
        %784 = vmatprep.subr.bf16.mxu0 0
        %785 = vmatpush1.bf16.xpose.msra.mxu0 0
        %786 = vmatprep.subr.bf16.mxu0 0
        %787 = vmatpush1.bf16.xpose.msra.mxu0 0
        %788 = vmatprep.subr.bf16.mxu0 0
        %789 = vmatpush1.bf16.xpose.msra.mxu0 0
        %790 = vmatprep.subr.bf16.mxu0 0
        %791 = vmatpush1.bf16.xpose.msra.mxu0 0
        %792 = vmatprep.subr.bf16.mxu0 0
        %793 = vmatpush1.bf16.xpose.msra.mxu0 0
        %794 = vmatprep.subr.bf16.mxu0 0
        %795 = vmatpush1.bf16.xpose.msra.mxu0 0
        %796 = vmatprep.subr.bf16.mxu0 0
        %797 = vmatpush1.bf16.xpose.msra.mxu0 0
        %798 = vmatprep.subr.bf16.mxu0 0
        %799 = vmatpush1.bf16.xpose.msra.mxu0 0
        %800 = vmatprep.subr.bf16.mxu0 0
        %801 = vmatpush1.bf16.xpose.msra.mxu0 0
        %802 = vmatprep.subr.bf16.mxu0 0
        %803 = vmatpush1.bf16.xpose.msra.mxu0 0
        %804 = vmatprep.subr.bf16.mxu0 0
        %805 = vmatpush1.bf16.xpose.msra.mxu0 0
        %806 = vmatprep.mubr.bf16.mxu0 0
        %807 = vmatmul.mubr.bf16.gmra.mrb[0].mxu0 %v769
        %v808 = vpop.f32.mrb[0].mxu0
        %v809 = vadd.f32 0.0, %v808
        %v810 = vpop.f32.mrb[0].mxu0
        %v811 = vpop.f32.mrb[0].mxu0
        %v812 = vpop.f32.mrb[0].mxu0
        %813 = vdwg.mxu0
        %v814 = vld [vmem:[%s344] sm:$0x3]
        %v815 = vunpack.c.0.s8 %v814
        %vm816 = vcmp.ne.s32.totalorder %v815, 0
        %v817 = vsel %vm816, 1, 0
        %vm818 = vcmp.eq.s32.totalorder %v817, 1
        %v819 = vsel %vm818, %v662, -1e+20
        %v820 = vsel %vm818, %v711, -1e+20
        %v821 = vsel %vm818, %v760, -1e+20
        %v822 = vsel %vm818, %v809, -1e+20
        %v823 = vsel %vm620, %v819, -inf
        %824 = vmax.xlane.f32.xlu0 %v823
        %v825 = vpop.xlane.xlu0 %824
        %v826 = vsel %vm620, %v820, -inf
        %827 = vmax.xlane.f32.xlu0 %v826
        %v828 = vpop.xlane.xlu0 %827
        %v829 = vsel %vm620, %v821, -inf
        %830 = vmax.xlane.f32.xlu0 %v829
        %v831 = vpop.xlane.xlu0 %830
        %v832 = vsel %vm620, %v822, -inf
        %833 = vmax.xlane.f32.xlu0 %v832
        %v834 = vpop.xlane.xlu0 %833
        %v835 = vsub.f32 %v819, %v825
        %v836 = vsub.f32 %v820, %v828
        %v837 = vsub.f32 %v821, %v831
        %v838 = vsub.f32 %v822, %v834
        %v839 = vmul.f32 %v835, 1.442695
        %v840 = vpow.pop %v839
        %v841 = vmul.f32 %v836, 1.442695
        %v842 = vpow.pop %v841
        %v843 = vmul.f32 %v837, 1.442695
        %v844 = vpow.pop %v843
        %v845 = vmul.f32 %v838, 1.442695
        %v846 = vpow.pop %v845
        %v847 = vsel %vm620, %v840, 0.0
        %848 = vadd.xlane.f32.xlu0 %v847
        %v849 = vpop.xlane.xlu0 %848
        %v850 = vsel %vm620, %v842, 0.0
        %851 = vadd.xlane.f32.xlu0 %v850
        %v852 = vpop.xlane.xlu0 %851
        %v853 = vsel %vm620, %v844, 0.0
        %854 = vadd.xlane.f32.xlu0 %v853
        %v855 = vpop.xlane.xlu0 %854
        %v856 = vsel %vm620, %v846, 0.0
        %857 = vadd.xlane.f32.xlu0 %v856
        %v858 = vpop.xlane.xlu0 %857
        %v859 = vrcp.pop %v849
        %v860 = vrcp.pop %v852
        %v861 = vrcp.pop %v855
        %v862 = vrcp.pop %v858
        %v863 = vmul.f32 %v840, %v859
        %v864 = vmul.f32 %v842, %v860
        %v865 = vmul.f32 %v844, %v861
        %v866 = vmul.f32 %v846, %v862
        %v867 = vpack.c.bf16 %v863, %v863
        %v868 = vpack.c.bf16 %v864, %v864
        %v869 = vpack.c.bf16 %v865, %v865
        %v870 = vpack.c.bf16 %v866, %v866
        %871 = vrot.lane.b32.xlu0 %v613, 112
        %v872 = vpop.permute.xlu0 %871
        %v874 = vsel %vm620, %v867, 0
        %vm876 = vcmask 1043456
        %v878 = vsel %vm876, %v872, 0
        %880 = vmatprep.subr.bf16.mxu0 0
        %881 = vmatpush1.bf16.msra.mxu0 %v878
        %882 = vmatprep.subr.bf16.mxu0 0
        %883 = vmatpush1.bf16.msra.mxu0 0
        %884 = vmatprep.subr.bf16.mxu0 0
        %885 = vmatpush1.bf16.msra.mxu0 0
        %886 = vmatprep.subr.bf16.mxu0 0
        %887 = vmatpush1.bf16.msra.mxu0 0
        %888 = vmatprep.subr.bf16.mxu0 0
        %889 = vmatpush1.bf16.msra.mxu0 0
        %890 = vmatprep.subr.bf16.mxu0 0
        %891 = vmatpush1.bf16.msra.mxu0 0
        %892 = vmatprep.subr.bf16.mxu0 0
        %893 = vmatpush1.bf16.msra.mxu0 0
        %894 = vmatprep.subr.bf16.mxu0 0
        %895 = vmatpush1.bf16.msra.mxu0 0
        %896 = vmatprep.subr.bf16.mxu0 0
        %897 = vmatpush1.bf16.msra.mxu0 0
        %898 = vmatprep.subr.bf16.mxu0 0
        %899 = vmatpush1.bf16.msra.mxu0 0
        %900 = vmatprep.subr.bf16.mxu0 0
        %901 = vmatpush1.bf16.msra.mxu0 0
        %902 = vmatprep.subr.bf16.mxu0 0
        %903 = vmatpush1.bf16.msra.mxu0 0
        %904 = vmatprep.subr.bf16.mxu0 0
        %905 = vmatpush1.bf16.msra.mxu0 0
        %906 = vmatprep.subr.bf16.mxu0 0
        %907 = vmatpush1.bf16.msra.mxu0 0
        %908 = vmatprep.subr.bf16.mxu0 0
        %909 = vmatpush1.bf16.msra.mxu0 0
        %910 = vmatprep.subr.bf16.mxu0 0
        %911 = vmatpush1.bf16.msra.mxu0 0
        %912 = vmatprep.mubr.bf16.mxu0 0
        %913 = vmatmul.mubr.bf16.gmra.mrb[0].mxu0 %v874
        %v914 = vpop.f32.mrb[0].mxu0
        %v915 = vadd.f32 0.0, %v914
        %v916 = vpop.f32.mrb[0].mxu0
        %v917 = vpop.f32.mrb[0].mxu0
        %v918 = vpop.f32.mrb[0].mxu0
        %919 = vdwg.mxu0
        %920 = vrot.lane.b32.xlu0 %v614, 112
        %v921 = vpop.permute.xlu0 %920
        %v923 = vsel %vm620, %v868, 0
        %v926 = vsel %vm876, %v921, 0
        %928 = vmatprep.subr.bf16.mxu0 0
        %929 = vmatpush1.bf16.msra.mxu0 %v926
        %930 = vmatprep.subr.bf16.mxu0 0
        %931 = vmatpush1.bf16.msra.mxu0 0
        %932 = vmatprep.subr.bf16.mxu0 0
        %933 = vmatpush1.bf16.msra.mxu0 0
        %934 = vmatprep.subr.bf16.mxu0 0
        %935 = vmatpush1.bf16.msra.mxu0 0
        %936 = vmatprep.subr.bf16.mxu0 0
        %937 = vmatpush1.bf16.msra.mxu0 0
        %938 = vmatprep.subr.bf16.mxu0 0
        %939 = vmatpush1.bf16.msra.mxu0 0
        %940 = vmatprep.subr.bf16.mxu0 0
        %941 = vmatpush1.bf16.msra.mxu0 0
        %942 = vmatprep.subr.bf16.mxu0 0
        %943 = vmatpush1.bf16.msra.mxu0 0
        %944 = vmatprep.subr.bf16.mxu0 0
        %945 = vmatpush1.bf16.msra.mxu0 0
        %946 = vmatprep.subr.bf16.mxu0 0
        %947 = vmatpush1.bf16.msra.mxu0 0
        %948 = vmatprep.subr.bf16.mxu0 0
        %949 = vmatpush1.bf16.msra.mxu0 0
        %950 = vmatprep.subr.bf16.mxu0 0
        %951 = vmatpush1.bf16.msra.mxu0 0
        %952 = vmatprep.subr.bf16.mxu0 0
        %953 = vmatpush1.bf16.msra.mxu0 0
        %954 = vmatprep.subr.bf16.mxu0 0
        %955 = vmatpush1.bf16.msra.mxu0 0
        %956 = vmatprep.subr.bf16.mxu0 0
        %957 = vmatpush1.bf16.msra.mxu0 0
        %958 = vmatprep.subr.bf16.mxu0 0
        %959 = vmatpush1.bf16.msra.mxu0 0
        %960 = vmatprep.mubr.bf16.mxu0 0
        %961 = vmatmul.mubr.bf16.gmra.mrb[0].mxu0 %v923
        %v962 = vpop.f32.mrb[0].mxu0
        %v963 = vadd.f32 0.0, %v962
        %v964 = vpop.f32.mrb[0].mxu0
        %v965 = vpop.f32.mrb[0].mxu0
        %v966 = vpop.f32.mrb[0].mxu0
        %967 = vdwg.mxu0
        %968 = vrot.lane.b32.xlu0 %v615, 112
        %v969 = vpop.permute.xlu0 %968
        %v971 = vsel %vm620, %v869, 0
        %v974 = vsel %vm876, %v969, 0
        %976 = vmatprep.subr.bf16.mxu0 0
        %977 = vmatpush1.bf16.msra.mxu0 %v974
        %978 = vmatprep.subr.bf16.mxu0 0
        %979 = vmatpush1.bf16.msra.mxu0 0
        %980 = vmatprep.subr.bf16.mxu0 0
        %981 = vmatpush1.bf16.msra.mxu0 0
        %982 = vmatprep.subr.bf16.mxu0 0
        %983 = vmatpush1.bf16.msra.mxu0 0
        %984 = vmatprep.subr.bf16.mxu0 0
        %985 = vmatpush1.bf16.msra.mxu0 0
        %986 = vmatprep.subr.bf16.mxu0 0
        %987 = vmatpush1.bf16.msra.mxu0 0
        %988 = vmatprep.subr.bf16.mxu0 0
        %989 = vmatpush1.bf16.msra.mxu0 0
        %990 = vmatprep.subr.bf16.mxu0 0
        %991 = vmatpush1.bf16.msra.mxu0 0
        %992 = vmatprep.subr.bf16.mxu0 0
        %993 = vmatpush1.bf16.msra.mxu0 0
        %994 = vmatprep.subr.bf16.mxu0 0
        %995 = vmatpush1.bf16.msra.mxu0 0
        %996 = vmatprep.subr.bf16.mxu0 0
        %997 = vmatpush1.bf16.msra.mxu0 0
        %998 = vmatprep.subr.bf16.mxu0 0
        %999 = vmatpush1.bf16.msra.mxu0 0
        %1000 = vmatprep.subr.bf16.mxu0 0
        %1001 = vmatpush1.bf16.msra.mxu0 0
        %1002 = vmatprep.subr.bf16.mxu0 0
        %1003 = vmatpush1.bf16.msra.mxu0 0
        %1004 = vmatprep.subr.bf16.mxu0 0
        %1005 = vmatpush1.bf16.msra.mxu0 0
        %1006 = vmatprep.subr.bf16.mxu0 0
        %1007 = vmatpush1.bf16.msra.mxu0 0
        %1008 = vmatprep.mubr.bf16.mxu0 0
        %1009 = vmatmul.mubr.bf16.gmra.mrb[0].mxu0 %v971
        %v1010 = vpop.f32.mrb[0].mxu0
        %v1011 = vadd.f32 0.0, %v1010
        %v1012 = vpop.f32.mrb[0].mxu0
        %v1013 = vpop.f32.mrb[0].mxu0
        %v1014 = vpop.f32.mrb[0].mxu0
        %1015 = vdwg.mxu0
        %1016 = vrot.lane.b32.xlu0 %v616, 112
        %v1017 = vpop.permute.xlu0 %1016
        %v1019 = vsel %vm620, %v870, 0
        %v1022 = vsel %vm876, %v1017, 0
        %1024 = vmatprep.subr.bf16.mxu0 0
        %1025 = vmatpush1.bf16.msra.mxu0 %v1022
        %1026 = vmatprep.subr.bf16.mxu0 0
        %1027 = vmatpush1.bf16.msra.mxu0 0
        %1028 = vmatprep.subr.bf16.mxu0 0
        %1029 = vmatpush1.bf16.msra.mxu0 0
        %1030 = vmatprep.subr.bf16.mxu0 0
        %1031 = vmatpush1.bf16.msra.mxu0 0
        %1032 = vmatprep.subr.bf16.mxu0 0
        %1033 = vmatpush1.bf16.msra.mxu0 0
        %1034 = vmatprep.subr.bf16.mxu0 0
        %1035 = vmatpush1.bf16.msra.mxu0 0
        %1036 = vmatprep.subr.bf16.mxu0 0
        %1037 = vmatpush1.bf16.msra.mxu0 0
        %1038 = vmatprep.subr.bf16.mxu0 0
        %1039 = vmatpush1.bf16.msra.mxu0 0
        %1040 = vmatprep.subr.bf16.mxu0 0
        %1041 = vmatpush1.bf16.msra.mxu0 0
        %1042 = vmatprep.subr.bf16.mxu0 0
        %1043 = vmatpush1.bf16.msra.mxu0 0
        %1044 = vmatprep.subr.bf16.mxu0 0
        %1045 = vmatpush1.bf16.msra.mxu0 0
        %1046 = vmatprep.subr.bf16.mxu0 0
        %1047 = vmatpush1.bf16.msra.mxu0 0
        %1048 = vmatprep.subr.bf16.mxu0 0
        %1049 = vmatpush1.bf16.msra.mxu0 0
        %1050 = vmatprep.subr.bf16.mxu0 0
        %1051 = vmatpush1.bf16.msra.mxu0 0
        %1052 = vmatprep.subr.bf16.mxu0 0
        %1053 = vmatpush1.bf16.msra.mxu0 0
        %1054 = vmatprep.subr.bf16.mxu0 0
        %1055 = vmatpush1.bf16.msra.mxu0 0
        %1056 = vmatprep.mubr.bf16.mxu0 0
        %1057 = vmatmul.mubr.bf16.gmra.mrb[0].mxu0 %v1019
        %v1058 = vpop.f32.mrb[0].mxu0
        %v1059 = vadd.f32 0.0, %v1058
        %v1060 = vpop.f32.mrb[0].mxu0
        %v1061 = vpop.f32.mrb[0].mxu0
        %v1062 = vpop.f32.mrb[0].mxu0
        %1063 = vdwg.mxu0
        %v1064 = vpack.c.bf16 %v915, %v915
        %v1065 = vpack.c.bf16 %v963, %v963
        %v1066 = vpack.c.bf16 %v1011, %v1011
        %v1067 = vpack.c.bf16 %v1059, %v1059
        %v1068 = vld [vmem:[%s4] sm:$0xf]
        %v1069 = vld [vmem:[%s4 + $0x4] sm:$0xf]
        %v1070 = vld [vmem:[%s4 + $0x8] sm:$0xf]
        %v1071 = vld [vmem:[%s4 + $0xc] sm:$0xf]
        %v1073 = vsel %vm620, %v1064, 0
        %v1076 = vsel %vm876, %v1068, 0
        %1078 = vmatprep.subr.bf16.mxu0 0
        %1079 = vmatpush1.bf16.msra.mxu0 %v1076
        %1080 = vmatprep.subr.bf16.mxu0 0
        %1081 = vmatpush1.bf16.msra.mxu0 0
        %1082 = vmatprep.subr.bf16.mxu0 0
        %1083 = vmatpush1.bf16.msra.mxu0 0
        %1084 = vmatprep.subr.bf16.mxu0 0
        %1085 = vmatpush1.bf16.msra.mxu0 0
        %1086 = vmatprep.subr.bf16.mxu0 0
        %1087 = vmatpush1.bf16.msra.mxu0 0
        %1088 = vmatprep.subr.bf16.mxu0 0
        %1089 = vmatpush1.bf16.msra.mxu0 0
        %1090 = vmatprep.subr.bf16.mxu0 0
        %1091 = vmatpush1.bf16.msra.mxu0 0
        %1092 = vmatprep.subr.bf16.mxu0 0
        %1093 = vmatpush1.bf16.msra.mxu0 0
        %1094 = vmatprep.subr.bf16.mxu0 0
        %1095 = vmatpush1.bf16.msra.mxu0 0
        %1096 = vmatprep.subr.bf16.mxu0 0
        %1097 = vmatpush1.bf16.msra.mxu0 0
        %1098 = vmatprep.subr.bf16.mxu0 0
        %1099 = vmatpush1.bf16.msra.mxu0 0
        %1100 = vmatprep.subr.bf16.mxu0 0
        %1101 = vmatpush1.bf16.msra.mxu0 0
        %1102 = vmatprep.subr.bf16.mxu0 0
        %1103 = vmatpush1.bf16.msra.mxu0 0
        %1104 = vmatprep.subr.bf16.mxu0 0
        %1105 = vmatpush1.bf16.msra.mxu0 0
        %1106 = vmatprep.subr.bf16.mxu0 0
        %1107 = vmatpush1.bf16.msra.mxu0 0
        %1108 = vmatprep.subr.bf16.mxu0 0
        %1109 = vmatpush1.bf16.msra.mxu0 0
        %1110 = vmatprep.mubr.bf16.mxu0 0
        %1111 = vmatmul.mubr.bf16.gmra.mrb[0].mxu0 %v1073
        %v1112 = vpop.f32.mrb[0].mxu0
        %v1113 = vadd.f32 0.0, %v1112
        %v1114 = vpop.f32.mrb[0].mxu0
        %v1115 = vpop.f32.mrb[0].mxu0
        %v1116 = vpop.f32.mrb[0].mxu0
        %1117 = vdwg.mxu0
        %v1119 = vsel %vm620, %v1065, 0
        %v1122 = vsel %vm876, %v1069, 0
        %1124 = vmatprep.subr.bf16.mxu0 0
        %1125 = vmatpush1.bf16.msra.mxu0 %v1122
        %1126 = vmatprep.subr.bf16.mxu0 0
        %1127 = vmatpush1.bf16.msra.mxu0 0
        %1128 = vmatprep.subr.bf16.mxu0 0
        %1129 = vmatpush1.bf16.msra.mxu0 0
        %1130 = vmatprep.subr.bf16.mxu0 0
        %1131 = vmatpush1.bf16.msra.mxu0 0
        %1132 = vmatprep.subr.bf16.mxu0 0
        %1133 = vmatpush1.bf16.msra.mxu0 0
        %1134 = vmatprep.subr.bf16.mxu0 0
        %1135 = vmatpush1.bf16.msra.mxu0 0
        %1136 = vmatprep.subr.bf16.mxu0 0
        %1137 = vmatpush1.bf16.msra.mxu0 0
        %1138 = vmatprep.subr.bf16.mxu0 0
        %1139 = vmatpush1.bf16.msra.mxu0 0
        %1140 = vmatprep.subr.bf16.mxu0 0
        %1141 = vmatpush1.bf16.msra.mxu0 0
        %1142 = vmatprep.subr.bf16.mxu0 0
        %1143 = vmatpush1.bf16.msra.mxu0 0
        %1144 = vmatprep.subr.bf16.mxu0 0
        %1145 = vmatpush1.bf16.msra.mxu0 0
        %1146 = vmatprep.subr.bf16.mxu0 0
        %1147 = vmatpush1.bf16.msra.mxu0 0
        %1148 = vmatprep.subr.bf16.mxu0 0
        %1149 = vmatpush1.bf16.msra.mxu0 0
        %1150 = vmatprep.subr.bf16.mxu0 0
        %1151 = vmatpush1.bf16.msra.mxu0 0
        %1152 = vmatprep.subr.bf16.mxu0 0
        %1153 = vmatpush1.bf16.msra.mxu0 0
        %1154 = vmatprep.subr.bf16.mxu0 0
        %1155 = vmatpush1.bf16.msra.mxu0 0
        %1156 = vmatprep.mubr.bf16.mxu0 0
        %1157 = vmatmul.mubr.bf16.gmra.mrb[0].mxu0 %v1119
        %v1158 = vpop.f32.mrb[0].mxu0
        %v1159 = vadd.f32 0.0, %v1158
        %v1160 = vpop.f32.mrb[0].mxu0
        %v1161 = vpop.f32.mrb[0].mxu0
        %v1162 = vpop.f32.mrb[0].mxu0
        %1163 = vdwg.mxu0
        %v1165 = vsel %vm620, %v1066, 0
        %v1168 = vsel %vm876, %v1070, 0
        %1170 = vmatprep.subr.bf16.mxu0 0
        %1171 = vmatpush1.bf16.msra.mxu0 %v1168
        %1172 = vmatprep.subr.bf16.mxu0 0
        %1173 = vmatpush1.bf16.msra.mxu0 0
        %1174 = vmatprep.subr.bf16.mxu0 0
        %1175 = vmatpush1.bf16.msra.mxu0 0
        %1176 = vmatprep.subr.bf16.mxu0 0
        %1177 = vmatpush1.bf16.msra.mxu0 0
        %1178 = vmatprep.subr.bf16.mxu0 0
        %1179 = vmatpush1.bf16.msra.mxu0 0
        %1180 = vmatprep.subr.bf16.mxu0 0
        %1181 = vmatpush1.bf16.msra.mxu0 0
        %1182 = vmatprep.subr.bf16.mxu0 0
        %1183 = vmatpush1.bf16.msra.mxu0 0
        %1184 = vmatprep.subr.bf16.mxu0 0
        %1185 = vmatpush1.bf16.msra.mxu0 0
        %1186 = vmatprep.subr.bf16.mxu0 0
        %1187 = vmatpush1.bf16.msra.mxu0 0
        %1188 = vmatprep.subr.bf16.mxu0 0
        %1189 = vmatpush1.bf16.msra.mxu0 0
        %1190 = vmatprep.subr.bf16.mxu0 0
        %1191 = vmatpush1.bf16.msra.mxu0 0
        %1192 = vmatprep.subr.bf16.mxu0 0
        %1193 = vmatpush1.bf16.msra.mxu0 0
        %1194 = vmatprep.subr.bf16.mxu0 0
        %1195 = vmatpush1.bf16.msra.mxu0 0
        %1196 = vmatprep.subr.bf16.mxu0 0
        %1197 = vmatpush1.bf16.msra.mxu0 0
        %1198 = vmatprep.subr.bf16.mxu0 0
        %1199 = vmatpush1.bf16.msra.mxu0 0
        %1200 = vmatprep.subr.bf16.mxu0 0
        %1201 = vmatpush1.bf16.msra.mxu0 0
        %1202 = vmatprep.mubr.bf16.mxu0 0
        %1203 = vmatmul.mubr.bf16.gmra.mrb[0].mxu0 %v1165
        %v1204 = vpop.f32.mrb[0].mxu0
        %v1205 = vadd.f32 0.0, %v1204
        %v1206 = vpop.f32.mrb[0].mxu0
        %v1207 = vpop.f32.mrb[0].mxu0
        %v1208 = vpop.f32.mrb[0].mxu0
        %1209 = vdwg.mxu0
        %v1211 = vsel %vm620, %v1067, 0
        %v1214 = vsel %vm876, %v1071, 0
        %1216 = vmatprep.subr.bf16.mxu0 0
        %1217 = vmatpush1.bf16.msra.mxu0 %v1214
        %1218 = vmatprep.subr.bf16.mxu0 0
        %1219 = vmatpush1.bf16.msra.mxu0 0
        %1220 = vmatprep.subr.bf16.mxu0 0
        %1221 = vmatpush1.bf16.msra.mxu0 0
        %1222 = vmatprep.subr.bf16.mxu0 0
        %1223 = vmatpush1.bf16.msra.mxu0 0
        %1224 = vmatprep.subr.bf16.mxu0 0
        %1225 = vmatpush1.bf16.msra.mxu0 0
        %1226 = vmatprep.subr.bf16.mxu0 0
        %1227 = vmatpush1.bf16.msra.mxu0 0
        %1228 = vmatprep.subr.bf16.mxu0 0
        %1229 = vmatpush1.bf16.msra.mxu0 0
        %1230 = vmatprep.subr.bf16.mxu0 0
        %1231 = vmatpush1.bf16.msra.mxu0 0
        %1232 = vmatprep.subr.bf16.mxu0 0
        %1233 = vmatpush1.bf16.msra.mxu0 0
        %1234 = vmatprep.subr.bf16.mxu0 0
        %1235 = vmatpush1.bf16.msra.mxu0 0
        %1236 = vmatprep.subr.bf16.mxu0 0
        %1237 = vmatpush1.bf16.msra.mxu0 0
        %1238 = vmatprep.subr.bf16.mxu0 0
        %1239 = vmatpush1.bf16.msra.mxu0 0
        %1240 = vmatprep.subr.bf16.mxu0 0
        %1241 = vmatpush1.bf16.msra.mxu0 0
        %1242 = vmatprep.subr.bf16.mxu0 0
        %1243 = vmatpush1.bf16.msra.mxu0 0
        %1244 = vmatprep.subr.bf16.mxu0 0
        %1245 = vmatpush1.bf16.msra.mxu0 0
        %1246 = vmatprep.subr.bf16.mxu0 0
        %1247 = vmatpush1.bf16.msra.mxu0 0
        %1248 = vmatprep.mubr.bf16.mxu0 0
        %1249 = vmatmul.mubr.bf16.gmra.mrb[0].mxu0 %v1211
        %v1250 = vpop.f32.mrb[0].mxu0
        %v1251 = vadd.f32 0.0, %v1250
        %v1252 = vpop.f32.mrb[0].mxu0
        %v1253 = vpop.f32.mrb[0].mxu0
        %v1254 = vpop.f32.mrb[0].mxu0
        %1255 = vdwg.mxu0
        %v1256 = vsel %vm405, %v1113, 0.0
        %v1257 = vsel %vm405, %v1159, 0.0
        %v1258 = vadd.f32 %v1256, %v1257
        %v1259 = vsel %vm405, %v1205, 0.0
        %v1260 = vadd.f32 %v1258, %v1259
        %v1261 = vsel %vm405, %v1251, 0.0
        %v1262 = vadd.f32 %v1260, %v1261
        %v1263 = vlaneseq
        %v1264 = vshrl.u32 %v1263, 7
        %v1265 = vsub.s32 0, %v1264
        %v1266 = vrot.slane %v347, %v1265
        %v1267 = vadd.f32 %v1262, %v1266
        %v1268 = vadd.f32 %v346, %v1267
        %v1269 = vsel %vm405, %v1268, 0.0
        %1270 = vadd.xlane.f32.xlu0 %v1269
        %v1271 = vpop.xlane.xlu0 %1270
        %v1272 = vrcp.pop 32.0
        %v1273 = vmul.f32 %v1271, %v1272
        %v1274 = vsub.f32 %v1268, %v1273
        %v1275 = vmul.f32 %v1274, %v1274
        %v1276 = vsel %vm405, %v1275, 0.0
        %1277 = vadd.xlane.f32.xlu0 %v1276
        %v1278 = vpop.xlane.xlu0 %1277
        %v1279 = vmul.f32 %v1278, %v1272
        %v1280 = vadd.f32 %v1279, 1e-05
        %v1281 = vrsqrt.pop %v1280
        %v1282 = vmul.f32 %v1274, %v1281
        %v1283 = vlaneseq
        %v1284 = vshrl.u32 %v1283, 7
        %v1285 = vsub.s32 1, %v1284
        %v1286 = vrot.slane %v347, %v1285
        %v1287 = vmul.f32 %v1282, %v1286
        %v1288 = vlaneseq
        %v1289 = vshrl.u32 %v1288, 7
        %v1290 = vsub.s32 2, %v1289
        %v1291 = vrot.slane %v347, %v1290
        %v1292 = vadd.f32 %v1287, %v1291
        %v1293 = vpack.c.bf16 %v1292, %v1292
        %v1294 = vld [vmem:[%s5] sm:$0xf]
        %v1295 = vld [vmem:[%s5 + $0x4] sm:$0xf]
        %v1296 = vld [vmem:[%s5 + $0x8] sm:$0xf]
        %v1297 = vld [vmem:[%s5 + $0xc] sm:$0xf]
        %v1298 = vld [vmem:[%s6] sm:$0x1]
        %v1300 = vlaneseq
        %v1301 = vshrl.u32 %v1300, 7
        %v1302 = vsub.s32 0, %v1301
        %v1303 = vrot.slane %v1298, %v1302
        %v1309 = vunpack.c.l.b16 %v1294
        %v1310 = vunpack.c.l.b16 %v1295
        %v1311 = vunpack.c.l.b16 %v1296
        %v1312 = vunpack.c.l.b16 %v1297
        %v1313 = vpack.c.b16 %v1310, %v1309
        %v1314 = vpack.c.b16 %v1312, %v1311
        %v1318 = vsel %vm405, %v1293, 0
        %1320 = vmatprep.subr.bf16.mxu0 0
        %1321 = vmatpush1.bf16.msra.mxu0 %v1313
        %1322 = vmatprep.subr.bf16.mxu0 0
        %1323 = vmatpush1.bf16.msra.mxu0 %v1314
        %1324 = vmatprep.subr.bf16.mxu0 0
        %1325 = vmatpush1.bf16.msra.mxu0 0
        %1326 = vmatprep.subr.bf16.mxu0 0
        %1327 = vmatpush1.bf16.msra.mxu0 0
        %1328 = vmatprep.subr.bf16.mxu0 0
        %1329 = vmatpush1.bf16.msra.mxu0 0
        %1330 = vmatprep.subr.bf16.mxu0 0
        %1331 = vmatpush1.bf16.msra.mxu0 0
        %1332 = vmatprep.subr.bf16.mxu0 0
        %1333 = vmatpush1.bf16.msra.mxu0 0
        %1334 = vmatprep.subr.bf16.mxu0 0
        %1335 = vmatpush1.bf16.msra.mxu0 0
        %1336 = vmatprep.subr.bf16.mxu0 0
        %1337 = vmatpush1.bf16.msra.mxu0 0
        %1338 = vmatprep.subr.bf16.mxu0 0
        %1339 = vmatpush1.bf16.msra.mxu0 0
        %1340 = vmatprep.subr.bf16.mxu0 0
        %1341 = vmatpush1.bf16.msra.mxu0 0
        %1342 = vmatprep.subr.bf16.mxu0 0
        %1343 = vmatpush1.bf16.msra.mxu0 0
        %1344 = vmatprep.subr.bf16.mxu0 0
        %1345 = vmatpush1.bf16.msra.mxu0 0
        %1346 = vmatprep.subr.bf16.mxu0 0
        %1347 = vmatpush1.bf16.msra.mxu0 0
        %1348 = vmatprep.subr.bf16.mxu0 0
        %1349 = vmatpush1.bf16.msra.mxu0 0
        %1350 = vmatprep.subr.bf16.mxu0 0
        %1351 = vmatpush1.bf16.msra.mxu0 0
        %1352 = vmatprep.mubr.bf16.mxu0 0
        %1353 = vmatmul.mubr.bf16.gmra.mrb[0].mxu0 %v1318
        %v1354 = vpop.f32.mrb[0].mxu0
        %v1355 = vadd.f32 %v1303, %v1354
        %v1356 = vpop.f32.mrb[0].mxu0
        %v1357 = vpop.f32.mrb[0].mxu0
        %v1358 = vpop.f32.mrb[0].mxu0
        %1359 = vdwg.mxu0
        %v1360 = vmax.f32 %v1355, 0.0
        %v1361 = vpack.c.bf16 %v1360, %v1360
        %v1362 = vld [vmem:[%s7] sm:$0xf]
        %v1363 = vld [vmem:[%s7 + $0x4] sm:$0xf]
        %v1364 = vld [vmem:[%s7 + $0x8] sm:$0xf]
        %v1365 = vld [vmem:[%s7 + $0xc] sm:$0xf]
        %v1366 = vld [vmem:[%s7 + $0x10] sm:$0xf]
        %v1367 = vld [vmem:[%s7 + $0x14] sm:$0xf]
        %v1368 = vld [vmem:[%s7 + $0x18] sm:$0xf]
        %v1369 = vld [vmem:[%s7 + $0x1c] sm:$0xf]
        %v1370 = vld [vmem:[%s7 + $0x20] sm:$0xf]
        %v1371 = vld [vmem:[%s7 + $0x24] sm:$0xf]
        %v1372 = vld [vmem:[%s7 + $0x28] sm:$0xf]
        %v1373 = vld [vmem:[%s7 + $0x2c] sm:$0xf]
        %v1374 = vld [vmem:[%s7 + $0x30] sm:$0xf]
        %v1375 = vld [vmem:[%s7 + $0x34] sm:$0xf]
        %v1376 = vld [vmem:[%s7 + $0x38] sm:$0xf]
        %v1377 = vld [vmem:[%s7 + $0x3c] sm:$0xf]
        %v1378 = vlaneseq
        %v1379 = vshrl.u32 %v1378, 7
        %v1380 = vsub.s32 3, %v1379
        %v1381 = vrot.slane %v347, %v1380
        %v1398 = vunpack.c.l.b16 %v1362
        %v1399 = vunpack.c.l.b16 %v1363
        %v1400 = vunpack.c.l.b16 %v1364
        %v1401 = vunpack.c.l.b16 %v1365
        %v1402 = vunpack.c.l.b16 %v1366
        %v1403 = vunpack.c.l.b16 %v1367
        %v1404 = vunpack.c.l.b16 %v1368
        %v1405 = vunpack.c.l.b16 %v1369
        %v1406 = vunpack.c.l.b16 %v1370
        %v1407 = vunpack.c.l.b16 %v1371
        %v1408 = vunpack.c.l.b16 %v1372
        %v1409 = vunpack.c.l.b16 %v1373
        %v1410 = vunpack.c.l.b16 %v1374
        %v1411 = vunpack.c.l.b16 %v1375
        %v1412 = vunpack.c.l.b16 %v1376
        %v1413 = vunpack.c.l.b16 %v1377
        %v1414 = vpack.c.b16 %v1399, %v1398
        %v1415 = vpack.c.b16 %v1401, %v1400
        %v1416 = vpack.c.b16 %v1403, %v1402
        %v1417 = vpack.c.b16 %v1405, %v1404
        %v1418 = vpack.c.b16 %v1407, %v1406
        %v1419 = vpack.c.b16 %v1409, %v1408
        %v1420 = vpack.c.b16 %v1411, %v1410
        %v1421 = vpack.c.b16 %v1413, %v1412
        %1430 = vmatprep.subr.bf16.mxu0 0
        %1431 = vmatpush1.bf16.msra.mxu0 %v1414
        %1432 = vmatprep.subr.bf16.mxu0 0
        %1433 = vmatpush1.bf16.msra.mxu0 %v1415
        %1434 = vmatprep.subr.bf16.mxu0 0
        %1435 = vmatpush1.bf16.msra.mxu0 %v1416
        %1436 = vmatprep.subr.bf16.mxu0 0
        %1437 = vmatpush1.bf16.msra.mxu0 %v1417
        %1438 = vmatprep.subr.bf16.mxu0 0
        %1439 = vmatpush1.bf16.msra.mxu0 %v1418
        %1440 = vmatprep.subr.bf16.mxu0 0
        %1441 = vmatpush1.bf16.msra.mxu0 %v1419
        %1442 = vmatprep.subr.bf16.mxu0 0
        %1443 = vmatpush1.bf16.msra.mxu0 %v1420
        %1444 = vmatprep.subr.bf16.mxu0 0
        %1445 = vmatpush1.bf16.msra.mxu0 %v1421
        %1446 = vmatprep.subr.bf16.mxu0 0
        %1447 = vmatpush1.bf16.msra.mxu0 0
        %1448 = vmatprep.subr.bf16.mxu0 0
        %1449 = vmatpush1.bf16.msra.mxu0 0
        %1450 = vmatprep.subr.bf16.mxu0 0
        %1451 = vmatpush1.bf16.msra.mxu0 0
        %1452 = vmatprep.subr.bf16.mxu0 0
        %1453 = vmatpush1.bf16.msra.mxu0 0
        %1454 = vmatprep.subr.bf16.mxu0 0
        %1455 = vmatpush1.bf16.msra.mxu0 0
        %1456 = vmatprep.subr.bf16.mxu0 0
        %1457 = vmatpush1.bf16.msra.mxu0 0
        %1458 = vmatprep.subr.bf16.mxu0 0
        %1459 = vmatpush1.bf16.msra.mxu0 0
        %1460 = vmatprep.subr.bf16.mxu0 0
        %1461 = vmatpush1.bf16.msra.mxu0 0
        %1462 = vmatprep.mubr.bf16.mxu0 0
        %1463 = vmatmul.mubr.bf16.gmra.mrb[0].mxu0 %v1361
        %v1464 = vpop.f32.mrb[0].mxu0
        %v1465 = vadd.f32 %v1381, %v1464
        %v1466 = vpop.f32.mrb[0].mxu0
        %v1467 = vpop.f32.mrb[0].mxu0
        %v1468 = vpop.f32.mrb[0].mxu0
        %1469 = vdwg.mxu0
        %v1470 = vadd.f32 %v1292, %v1465
        %v1471 = vsel %vm405, %v1470, 0.0
        %1472 = vadd.xlane.f32.xlu0 %v1471
        %v1473 = vpop.xlane.xlu0 %1472
        %v1474 = vmul.f32 %v1473, %v1272
        %v1475 = vsub.f32 %v1470, %v1474
        %v1476 = vmul.f32 %v1475, %v1475
        %v1477 = vsel %vm405, %v1476, 0.0
        %1478 = vadd.xlane.f32.xlu0 %v1477
        %v1479 = vpop.xlane.xlu0 %1478
        %v1480 = vmul.f32 %v1479, %v1272
        %v1481 = vadd.f32 %v1480, 1e-05
        %v1482 = vrsqrt.pop %v1481
        %v1483 = vmul.f32 %v1475, %v1482
        %v1484 = vlaneseq
        %v1485 = vshrl.u32 %v1484, 7
        %v1486 = vsub.s32 4, %v1485
        %v1487 = vrot.slane %v347, %v1486
        %v1488 = vmul.f32 %v1483, %v1487
        %v1489 = vlaneseq
        %v1490 = vshrl.u32 %v1489, 7
        %v1491 = vsub.s32 5, %v1490
        %v1492 = vrot.slane %v347, %v1491
        %v1493 = vadd.f32 %v1488, %v1492
        %1494 = vst.msk [vmem:[%s336] sm:$0xff] %vm405, %v1493
        %s1495 = sand.u32 %s230, 1
        %s1496 = scalar_lea.sflag [#allocation3], %s1495
        %s1497 = sand.u32 %s230, 1
        %s1498 = smul.addr %s1497, 8
        %s1499 = scalar_lea.vmem [#allocation2], %s1498
        // Predicated region
        $region57: #{tpu_custom_call.1} parent=55 // pred_check
          %p1500 = pneg %p240
        $region58: #{tpu_custom_call.1} parent=55 // pred_check_branch
          %1502 = sbr.rel (%p1500) target = $region60
        $region59: #{tpu_custom_call.1} parent=55 // pred_region
          %s1504 = ssub.s32 128, 128
          %1505 = vsyncadd %s1496, %s1504
          %s1506 = smul.addr %s23, 128
          %s1507 = scalar_lea.hbm %s9, %s1506
          %s1509 = sshll.u32 %s1499, 4
          %s1510 = int_to_ptr.vmem [resolvable:$true] %s1509
          %1512 = dma.vmem_to_hbm [thread:$0]  %s1510, 128, %s1507, %s1496
        $region60: #{tpu_custom_call.1} parent=55 // pred_fallthru
          _
      $region56: #{tpu_custom_call.1} parent=5 // pred_fallthru
        _
      %p1513 = scmp.le.s32.totalorder 2, %s18
      // Predicated region
      $region61: #{tpu_custom_call.1} parent=5 // pred_check
        %p1514 = pneg %p1513
      $region62: #{tpu_custom_call.1} parent=5 // pred_check_branch
        %1516 = sbr.rel (%p1514) target = $region64
      $region63: #{tpu_custom_call.1} parent=5 // pred_region
        %s1517 = ssub.s32 %s18, 2
        // Predicated region
        $region65: #{tpu_custom_call.1} parent=63 // pred_check
          %p1518 = pneg %p246
        $region66: #{tpu_custom_call.1} parent=63 // pred_check_branch
          %1520 = sbr.rel (%p1518) target = $region68
        $region67: #{tpu_custom_call.1} parent=63 // pred_region
          %s1521 = sand.u32 %s231, 1
          %s1522 = scalar_lea.sflag [#allocation3], %s1521
          %s1523 = sand.u32 %s231, 1
          %s1524 = smul.addr %s1523, 8
          %s1525 = scalar_lea.vmem [#allocation2], %s1524
          %1526 = dma.done %s1522, 128
        $region68: #{tpu_custom_call.1} parent=63 // pred_fallthru
          _
      $region64: #{tpu_custom_call.1} parent=5 // pred_fallthru
        _
    $region6: #{tpu_custom_call.1} parent=1 // loop_footer
      %s22 = sadd.s32 1, %s18
    $region7: #{tpu_custom_call.1} parent=1 // loop_footer_branch
      %17 = sbr.rel target = $region3
    $region8: #{tpu_custom_call.1} parent=1 // loop_exit
      _
    %1527 = vsyncpa [#allocation3], 1
    %s1528 = scalar_lea.sflag [#allocation3], 1
    %1529 = vsyncpa %s1528, 1

</llo_original>
